<compile_context>
chip_gen: v7x
topology: tpu7x:2x2x1
jax: 0.10.0
libtpu: 0.0.40
codegen_flags: <defaults>
</compile_context>

<pallas_src>
import functools

import jax
import jax.numpy as jnp
import numpy as np
from jax import lax
from jax.experimental import pallas as pl
from jax.experimental.pallas import tpu as pltpu

# ---- constants from the module ------------------------------------------------------
POLYLINE_TYPES = {
    "AGENT_OF_INTEREST": 0, "AGENT_NO": 1, "AGENT_CAR": 2, "AGENT_BIKE": 3,
    "AGENT_PEDESTRIAN": 4, "TL_UNKNOWN": 5, "TL_RED": 6, "TL_YELLOW": 7,
    "TL_GREEN": 8, "TL_NONE": 9, "CROSSWALK": 10, "LANE_BDRY_LEFT": 11,
    "LANE_BDRY_RIGHT": 12,
}
NUM_POLYLINE_TYPES = len(POLYLINE_TYPES)  # 13

# l5kit PERCEPTION_LABEL_TO_INDEX values
PERCEPTION_LABEL_CAR = 3
PERCEPTION_LABEL_CYCLIST = 12
PERCEPTION_LABEL_PEDESTRIAN = 14


# ---- Pallas kernel -------------------------------------------------------------------
def _embed_kernel(code_ref, table_ref, o_ref, *, lanes_start, cw_start, bdry_start):
    # code_ref : (TB, 1, L) int32   packed agent-label / TL-code stream (lane-dense on L)
    # table_ref: (13, E)    f32     embedding table (constant block, resident)
    # o_ref    : (TB, L, E) f32
    code = code_ref[...][:, 0, :]                        # (TB, L)
    TB, L = code.shape

    pos = lax.broadcasted_iota(jnp.int32, (TB, L), 1)    # position along the sequence

    # perception label -> polyline type for the "other agents" region
    agent_idx = jnp.where(
        code == PERCEPTION_LABEL_CAR, POLYLINE_TYPES["AGENT_CAR"],
        jnp.where(code == PERCEPTION_LABEL_PEDESTRIAN, POLYLINE_TYPES["AGENT_PEDESTRIAN"],
                  jnp.where(code == PERCEPTION_LABEL_CYCLIST, POLYLINE_TYPES["AGENT_BIKE"],
                            POLYLINE_TYPES["AGENT_NO"]))).astype(jnp.int32)

    # traffic-light code -> TL_* type; clamp so the resulting index stays in [0, 12]
    # (nn.Embedding would raise on out-of-range codes; we clamp instead of producing
    # silent zeros as the old one-hot path did).
    tl_idx = POLYLINE_TYPES["TL_UNKNOWN"] + jnp.clip(code, 0, 4)

    idx = jnp.full((TB, L), POLYLINE_TYPES["AGENT_NO"], jnp.int32)
    idx = jnp.where(pos == 0, POLYLINE_TYPES["AGENT_OF_INTEREST"], idx)
    idx = jnp.where((pos >= 1) & (pos < lanes_start), agent_idx, idx)
    idx = jnp.where((pos >= lanes_start) & (pos < cw_start), tl_idx, idx)
    idx = jnp.where((pos >= cw_start) & (pos < bdry_start),
                    POLYLINE_TYPES["CROSSWALK"], idx)
    bdry_left = ((pos - bdry_start) & 1) == 0
    idx = jnp.where(pos >= bdry_start,
                    jnp.where(bdry_left, POLYLINE_TYPES["LANE_BDRY_LEFT"],
                              POLYLINE_TYPES["LANE_BDRY_RIGHT"]),
                    idx)

    # Embedding lookup as an exact 13-way select chain on the VPU (bit-exact f32 rows,
    # no MXU bf16-emulation). Exactly one type matches per position, so a select chain
    # starting from row 0 is a gather.
    idx_c = idx[:, :, None]                              # (TB, L, 1)
    out = jnp.broadcast_to(table_ref[0, :], (TB, L, o_ref.shape[-1]))
    for t in range(1, NUM_POLYLINE_TYPES):
        out = jnp.where(idx_c == t, table_ref[t, :], out)
    o_ref[...] = out.astype(o_ref.dtype)


# ---- batch-tile selection -------------------------------------------------------------
def _choose_batch_tile(B, total_len, E):
    """Largest divisor of B giving ~2 MiB f32 output blocks, with >=2 grid steps."""
    per_b_bytes = total_len * E * 4
    target_bytes = 2 << 20
    cap = max(1, target_bytes // max(per_b_bytes, 1))
    if B >= 2:
        cap = min(cap, max(1, B // 2))   # keep >=2 grid steps (v7x 2 TCs / megacore)
    cap = min(cap, B)
    tb = 1
    for d in range(1, cap + 1):
        if B % d == 0:
            tb = d
    return tb


# ---- wrapper (glue: packing / shape bookkeeping in plain JAX) -------------------------
def vectorized_embedding_forward(data_batch, embedding_table):
    polyline_types = data_batch["type"]
    other_agents_types = data_batch["all_other_agents_types"].astype(jnp.int32)

    B = polyline_types.shape[0]
    other_agents_len = other_agents_types.shape[1]
    lanes_len = data_batch["lanes_mid"].shape[1]
    crosswalks_len = data_batch["crosswalks"].shape[1]
    lanes_bdry_len = data_batch["lanes"].shape[1]

    total_len = 1 + other_agents_len + lanes_len + crosswalks_len + lanes_bdry_len
    lanes_start = 1 + other_agents_len
    cw_start = lanes_start + lanes_len
    bdry_start = cw_start + crosswalks_len

    # traffic-light code per lane (float -> int truncation, like torch copy_ to long)
    tl_codes = data_batch["lanes_mid"][:, :, 0, -1].astype(jnp.int32)   # (B, lanes_len)

    # Single position-aligned int32 "code" stream: agent labels and TL codes occupy
    # disjoint position ranges, so one array carries both (one DMA stream).
    code = jnp.zeros((B, total_len), jnp.int32)
    code = code.at[:, 1:lanes_start].set(other_agents_types)
    code = code.at[:, lanes_start:cw_start].set(tl_codes)
    # (B, 1, total_len): block's last two dims equal the full array dims (no 8/128
    # constraint on the leading batch-tile dim), and total_len sits on the lane axis.
    code = code[:, None, :]

    E = embedding_table.shape[1]
    TB = _choose_batch_tile(B, total_len, E)
    grid = (B // TB,)

    kernel = functools.partial(_embed_kernel, lanes_start=lanes_start,
                               cw_start=cw_start, bdry_start=bdry_start)

    return pl.pallas_call(
        kernel,
        out_shape=jax.ShapeDtypeStruct((B, total_len, E), embedding_table.dtype),
        grid=grid,
        in_specs=[
            pl.BlockSpec((TB, 1, total_len), lambda b: (b, 0, 0)),
            # constant index_map -> the table block is fetched once and stays resident
            pl.BlockSpec((NUM_POLYLINE_TYPES, E), lambda b: (0, 0)),
        ],
        out_specs=pl.BlockSpec((TB, total_len, E), lambda b: (b, 0, 0)),
        compiler_params=pltpu.CompilerParams(
            dimension_semantics=("parallel",),
            vmem_limit_bytes=32 * 1024 * 1024),
    )(code, embedding_table)


# ---- pure-JAX/NumPy reference (same semantics) ----------------------------------------
def _reference(data_batch, embedding_table):
    other = np.asarray(data_batch["all_other_agents_types"]).astype(np.int32)
    B, Na = other.shape
    Nl = data_batch["lanes_mid"].shape[1]
    Nc = data_batch["crosswalks"].shape[1]
    Nb = data_batch["lanes"].shape[1]
    total_len = 1 + Na + Nl + Nc + Nb
    idx = np.full((B, total_len), POLYLINE_TYPES["AGENT_NO"], np.int32)
    idx[:, 0] = POLYLINE_TYPES["AGENT_OF_INTEREST"]
    agent_seg = np.full_like(other, POLYLINE_TYPES["AGENT_NO"])
    agent_seg[other == PERCEPTION_LABEL_CAR] = POLYLINE_TYPES["AGENT_CAR"]
    agent_seg[other == PERCEPTION_LABEL_PEDESTRIAN] = POLYLINE_TYPES["AGENT_PEDESTRIAN"]
    agent_seg[other == PERCEPTION_LABEL_CYCLIST] = POLYLINE_TYPES["AGENT_BIKE"]
    idx[:, 1:1 + Na] = agent_seg
    tl = np.asarray(data_batch["lanes_mid"][:, :, 0, -1]).astype(np.int32)
    idx[:, 1 + Na:1 + Na + Nl] = tl + POLYLINE_TYPES["TL_UNKNOWN"]
    idx[:, 1 + Na + Nl:1 + Na + Nl + Nc] = POLYLINE_TYPES["CROSSWALK"]
    bdry = 1 + Na + Nl + Nc
    idx[:, bdry::2] = POLYLINE_TYPES["LANE_BDRY_LEFT"]
    idx[:, bdry + 1::2] = POLYLINE_TYPES["LANE_BDRY_RIGHT"]
    return np.asarray(embedding_table)[idx]


# ---- main ------------------------------------------------------------------------------
if __name__ == "__main__":
    key = jax.random.PRNGKey(0)
    k_emb, k_agents, k_tl, k_lm, k_cw, k_ln = jax.random.split(key, 6)

    B = 8
    other_agents_len = 8
    lanes_len = 16
    crosswalks_len = 4
    lanes_bdry_len = 8          # even (left/right pairs)
    embedding_dim = 128         # lane-dense output (production l5kit uses 256)
    total_len = 1 + other_agents_len + lanes_len + crosswalks_len + lanes_bdry_len

    # nn.Embedding(13, embedding_dim) default init ~ N(0, 1), deterministic here
    embedding_table = jax.random.normal(k_emb, (NUM_POLYLINE_TYPES, embedding_dim),
                                        dtype=jnp.float32)

    data_batch = {
        "type": jnp.zeros((B,), jnp.int32),  # only its length (batch size) is used
        "all_other_agents_types": jax.random.randint(
            k_agents, (B, other_agents_len), 0, 17, dtype=jnp.int32),
        "lanes_mid": jax.random.normal(k_lm, (B, lanes_len, 3, 3), jnp.float32)
            .at[:, :, 0, -1].set(
                jax.random.randint(k_tl, (B, lanes_len), 0, 5).astype(jnp.float32)),
        "crosswalks": jax.random.normal(k_cw, (B, crosswalks_len, 5, 2), jnp.float32),
        "lanes": jax.random.normal(k_ln, (B, lanes_bdry_len, 3, 3), jnp.float32),
    }

    out = vectorized_embedding_forward(data_batch, embedding_table)
    out = jax.block_until_ready(out)

    ref = _reference(data_batch, embedding_table)
    assert out.shape == (B, total_len, embedding_dim), out.shape
    assert out.dtype == jnp.float32
    np.testing.assert_allclose(np.asarray(out), ref, rtol=1e-6, atol=1e-6)

    print("KERNEL_OK")
</pallas_src>

<mosaic_0001>
module attributes {stable_mosaic.version = 11 : i64} {
  func.func @_embed_kernel(%arg0: i32, %arg1: memref<4x1x37xi32, #tpu.memory_space<vmem>>, %arg2: memref<13x128xf32, #tpu.memory_space<vmem>>, %arg3: memref<4x37x128xf32, #tpu.memory_space<vmem>>) attributes {dimension_semantics = [#tpu.dimension_semantics<parallel>], iteration_bounds = array<i64: 2>, scalar_prefetch = 0 : i64, scratch_operands = 0 : i64, tpu.core_type = #tpu.core_type<tc>, window_params = [{transform_indices = @transform_0, window_bounds = array<i64: 4, 1, 37>}, {pipeline_mode = #tpu.pipeline_mode<synchronous>, transform_indices = @transform_1, window_bounds = array<i64: 13, 128>}, {transform_indices = @transform_2, window_bounds = array<i64: 4, 37, 128>}]} {
    %c0 = arith.constant 0 : index
    %c0_0 = arith.constant 0 : index
    %c0_1 = arith.constant 0 : index
    %0 = vector.load %arg1[%c0, %c0_0, %c0_1] : memref<4x1x37xi32, #tpu.memory_space<vmem>>, vector<4x1x37xi32>
    %1 = vector.shape_cast %0 : vector<4x1x37xi32> to vector<4x37xi32>
    %2 = tpu.iota {dimensions = array<i32: 1>} : vector<4x37xi32>
    %c3_i32 = arith.constant 3 : i32
    %3 = vector.broadcast %c3_i32 : i32 to vector<4x37xi32>
    %4 = arith.cmpi eq, %1, %3 : vector<4x37xi32>
    %c14_i32 = arith.constant 14 : i32
    %5 = vector.broadcast %c14_i32 : i32 to vector<4x37xi32>
    %6 = arith.cmpi eq, %1, %5 : vector<4x37xi32>
    %c12_i32 = arith.constant 12 : i32
    %7 = vector.broadcast %c12_i32 : i32 to vector<4x37xi32>
    %8 = arith.cmpi eq, %1, %7 : vector<4x37xi32>
    %c3_i32_2 = arith.constant 3 : i32
    %c1_i32 = arith.constant 1 : i32
    %9 = vector.broadcast %c3_i32_2 : i32 to vector<4x37xi32>
    %10 = vector.broadcast %c1_i32 : i32 to vector<4x37xi32>
    %11 = arith.select %8, %9, %10 : vector<4x37xi1>, vector<4x37xi32>
    %c4_i32 = arith.constant 4 : i32
    %12 = vector.broadcast %c4_i32 : i32 to vector<4x37xi32>
    %13 = arith.select %6, %12, %11 : vector<4x37xi1>, vector<4x37xi32>
    %c2_i32 = arith.constant 2 : i32
    %14 = vector.broadcast %c2_i32 : i32 to vector<4x37xi32>
    %15 = arith.select %4, %14, %13 : vector<4x37xi1>, vector<4x37xi32>
    %c0_i32 = arith.constant 0 : i32
    %c4_i32_3 = arith.constant 4 : i32
    %16 = vector.broadcast %c0_i32 : i32 to vector<4x37xi32>
    %17 = arith.maxsi %16, %1 : vector<4x37xi32>
    %18 = vector.broadcast %c4_i32_3 : i32 to vector<4x37xi32>
    %19 = arith.minsi %18, %17 : vector<4x37xi32>
    %c5_i32 = arith.constant 5 : i32
    %20 = vector.broadcast %c5_i32 : i32 to vector<4x37xi32>
    %21 = arith.addi %20, %19 : vector<4x37xi32>
    %c1_i32_4 = arith.constant 1 : i32
    %22 = vector.broadcast %c1_i32_4 : i32 to vector<4x37xi32>
    %c0_i32_5 = arith.constant 0 : i32
    %23 = vector.broadcast %c0_i32_5 : i32 to vector<4x37xi32>
    %24 = arith.cmpi eq, %2, %23 : vector<4x37xi32>
    %c0_i32_6 = arith.constant 0 : i32
    %25 = vector.broadcast %c0_i32_6 : i32 to vector<4x37xi32>
    %26 = arith.select %24, %25, %22 : vector<4x37xi1>, vector<4x37xi32>
    %c1_i32_7 = arith.constant 1 : i32
    %27 = vector.broadcast %c1_i32_7 : i32 to vector<4x37xi32>
    %28 = arith.cmpi sge, %2, %27 : vector<4x37xi32>
    %c9_i32 = arith.constant 9 : i32
    %29 = vector.broadcast %c9_i32 : i32 to vector<4x37xi32>
    %30 = arith.cmpi slt, %2, %29 : vector<4x37xi32>
    %31 = arith.andi %28, %30 : vector<4x37xi1>
    %32 = arith.select %31, %15, %26 : vector<4x37xi1>, vector<4x37xi32>
    %c9_i32_8 = arith.constant 9 : i32
    %33 = vector.broadcast %c9_i32_8 : i32 to vector<4x37xi32>
    %34 = arith.cmpi sge, %2, %33 : vector<4x37xi32>
    %c25_i32 = arith.constant 25 : i32
    %35 = vector.broadcast %c25_i32 : i32 to vector<4x37xi32>
    %36 = arith.cmpi slt, %2, %35 : vector<4x37xi32>
    %37 = arith.andi %34, %36 : vector<4x37xi1>
    %38 = arith.select %37, %21, %32 : vector<4x37xi1>, vector<4x37xi32>
    %c25_i32_9 = arith.constant 25 : i32
    %39 = vector.broadcast %c25_i32_9 : i32 to vector<4x37xi32>
    %40 = arith.cmpi sge, %2, %39 : vector<4x37xi32>
    %c29_i32 = arith.constant 29 : i32
    %41 = vector.broadcast %c29_i32 : i32 to vector<4x37xi32>
    %42 = arith.cmpi slt, %2, %41 : vector<4x37xi32>
    %43 = arith.andi %40, %42 : vector<4x37xi1>
    %c10_i32 = arith.constant 10 : i32
    %44 = vector.broadcast %c10_i32 : i32 to vector<4x37xi32>
    %45 = arith.select %43, %44, %38 : vector<4x37xi1>, vector<4x37xi32>
    %c29_i32_10 = arith.constant 29 : i32
    %46 = vector.broadcast %c29_i32_10 : i32 to vector<4x37xi32>
    %47 = arith.subi %2, %46 : vector<4x37xi32>
    %c1_i32_11 = arith.constant 1 : i32
    %48 = vector.broadcast %c1_i32_11 : i32 to vector<4x37xi32>
    %49 = arith.andi %47, %48 : vector<4x37xi32>
    %c0_i32_12 = arith.constant 0 : i32
    %50 = vector.broadcast %c0_i32_12 : i32 to vector<4x37xi32>
    %51 = arith.cmpi eq, %49, %50 : vector<4x37xi32>
    %c29_i32_13 = arith.constant 29 : i32
    %52 = vector.broadcast %c29_i32_13 : i32 to vector<4x37xi32>
    %53 = arith.cmpi sge, %2, %52 : vector<4x37xi32>
    %c11_i32 = arith.constant 11 : i32
    %c12_i32_14 = arith.constant 12 : i32
    %54 = vector.broadcast %c11_i32 : i32 to vector<4x37xi32>
    %55 = vector.broadcast %c12_i32_14 : i32 to vector<4x37xi32>
    %56 = arith.select %51, %54, %55 : vector<4x37xi1>, vector<4x37xi32>
    %57 = arith.select %53, %56, %45 : vector<4x37xi1>, vector<4x37xi32>
    %58 = vector.shape_cast %57 : vector<4x37xi32> to vector<4x37x1xi32>
    %c0_15 = arith.constant 0 : index
    %c0_16 = arith.constant 0 : index
    %59 = vector.load %arg2[%c0_15, %c0_16] : memref<13x128xf32, #tpu.memory_space<vmem>>, vector<1x128xf32>
    %60 = vector.shape_cast %59 : vector<1x128xf32> to vector<128xf32>
    %61 = vector.shape_cast %60 : vector<128xf32> to vector<1x1x128xf32>
    %62 = vector.broadcast %61 : vector<1x1x128xf32> to vector<4x37x128xf32>
    %c1_i32_17 = arith.constant 1 : i32
    %63 = vector.broadcast %c1_i32_17 : i32 to vector<4x37x1xi32>
    %64 = arith.cmpi eq, %58, %63 : vector<4x37x1xi32>
    %c1 = arith.constant 1 : index
    %c0_18 = arith.constant 0 : index
    %65 = vector.load %arg2[%c1, %c0_18] : memref<13x128xf32, #tpu.memory_space<vmem>>, vector<1x128xf32>
    %66 = vector.shape_cast %65 : vector<1x128xf32> to vector<128xf32>
    %67 = vector.shape_cast %64 : vector<4x37x1xi1> to vector<4x37x1xi1>
    %68 = vector.broadcast %67 : vector<4x37x1xi1> to vector<4x37x128xi1>
    %69 = vector.shape_cast %66 : vector<128xf32> to vector<1x1x128xf32>
    %70 = vector.broadcast %69 : vector<1x1x128xf32> to vector<4x37x128xf32>
    %71 = arith.select %68, %70, %62 : vector<4x37x128xi1>, vector<4x37x128xf32>
    %c2_i32_19 = arith.constant 2 : i32
    %72 = vector.broadcast %c2_i32_19 : i32 to vector<4x37x1xi32>
    %73 = arith.cmpi eq, %58, %72 : vector<4x37x1xi32>
    %c2 = arith.constant 2 : index
    %c0_20 = arith.constant 0 : index
    %74 = vector.load %arg2[%c2, %c0_20] : memref<13x128xf32, #tpu.memory_space<vmem>>, vector<1x128xf32>
    %75 = vector.shape_cast %74 : vector<1x128xf32> to vector<128xf32>
    %76 = vector.shape_cast %73 : vector<4x37x1xi1> to vector<4x37x1xi1>
    %77 = vector.broadcast %76 : vector<4x37x1xi1> to vector<4x37x128xi1>
    %78 = vector.shape_cast %75 : vector<128xf32> to vector<1x1x128xf32>
    %79 = vector.broadcast %78 : vector<1x1x128xf32> to vector<4x37x128xf32>
    %80 = arith.select %77, %79, %71 : vector<4x37x128xi1>, vector<4x37x128xf32>
    %c3_i32_21 = arith.constant 3 : i32
    %81 = vector.broadcast %c3_i32_21 : i32 to vector<4x37x1xi32>
    %82 = arith.cmpi eq, %58, %81 : vector<4x37x1xi32>
    %c3 = arith.constant 3 : index
    %c0_22 = arith.constant 0 : index
    %83 = vector.load %arg2[%c3, %c0_22] : memref<13x128xf32, #tpu.memory_space<vmem>>, vector<1x128xf32>
    %84 = vector.shape_cast %83 : vector<1x128xf32> to vector<128xf32>
    %85 = vector.shape_cast %82 : vector<4x37x1xi1> to vector<4x37x1xi1>
    %86 = vector.broadcast %85 : vector<4x37x1xi1> to vector<4x37x128xi1>
    %87 = vector.shape_cast %84 : vector<128xf32> to vector<1x1x128xf32>
    %88 = vector.broadcast %87 : vector<1x1x128xf32> to vector<4x37x128xf32>
    %89 = arith.select %86, %88, %80 : vector<4x37x128xi1>, vector<4x37x128xf32>
    %c4_i32_23 = arith.constant 4 : i32
    %90 = vector.broadcast %c4_i32_23 : i32 to vector<4x37x1xi32>
    %91 = arith.cmpi eq, %58, %90 : vector<4x37x1xi32>
    %c4 = arith.constant 4 : index
    %c0_24 = arith.constant 0 : index
    %92 = vector.load %arg2[%c4, %c0_24] : memref<13x128xf32, #tpu.memory_space<vmem>>, vector<1x128xf32>
    %93 = vector.shape_cast %92 : vector<1x128xf32> to vector<128xf32>
    %94 = vector.shape_cast %91 : vector<4x37x1xi1> to vector<4x37x1xi1>
    %95 = vector.broadcast %94 : vector<4x37x1xi1> to vector<4x37x128xi1>
    %96 = vector.shape_cast %93 : vector<128xf32> to vector<1x1x128xf32>
    %97 = vector.broadcast %96 : vector<1x1x128xf32> to vector<4x37x128xf32>
    %98 = arith.select %95, %97, %89 : vector<4x37x128xi1>, vector<4x37x128xf32>
    %c5_i32_25 = arith.constant 5 : i32
    %99 = vector.broadcast %c5_i32_25 : i32 to vector<4x37x1xi32>
    %100 = arith.cmpi eq, %58, %99 : vector<4x37x1xi32>
    %c5 = arith.constant 5 : index
    %c0_26 = arith.constant 0 : index
    %101 = vector.load %arg2[%c5, %c0_26] : memref<13x128xf32, #tpu.memory_space<vmem>>, vector<1x128xf32>
    %102 = vector.shape_cast %101 : vector<1x128xf32> to vector<128xf32>
    %103 = vector.shape_cast %100 : vector<4x37x1xi1> to vector<4x37x1xi1>
    %104 = vector.broadcast %103 : vector<4x37x1xi1> to vector<4x37x128xi1>
    %105 = vector.shape_cast %102 : vector<128xf32> to vector<1x1x128xf32>
    %106 = vector.broadcast %105 : vector<1x1x128xf32> to vector<4x37x128xf32>
    %107 = arith.select %104, %106, %98 : vector<4x37x128xi1>, vector<4x37x128xf32>
    %c6_i32 = arith.constant 6 : i32
    %108 = vector.broadcast %c6_i32 : i32 to vector<4x37x1xi32>
    %109 = arith.cmpi eq, %58, %108 : vector<4x37x1xi32>
    %c6 = arith.constant 6 : index
    %c0_27 = arith.constant 0 : index
    %110 = vector.load %arg2[%c6, %c0_27] : memref<13x128xf32, #tpu.memory_space<vmem>>, vector<1x128xf32>
    %111 = vector.shape_cast %110 : vector<1x128xf32> to vector<128xf32>
    %112 = vector.shape_cast %109 : vector<4x37x1xi1> to vector<4x37x1xi1>
    %113 = vector.broadcast %112 : vector<4x37x1xi1> to vector<4x37x128xi1>
    %114 = vector.shape_cast %111 : vector<128xf32> to vector<1x1x128xf32>
    %115 = vector.broadcast %114 : vector<1x1x128xf32> to vector<4x37x128xf32>
    %116 = arith.select %113, %115, %107 : vector<4x37x128xi1>, vector<4x37x128xf32>
    %c7_i32 = arith.constant 7 : i32
    %117 = vector.broadcast %c7_i32 : i32 to vector<4x37x1xi32>
    %118 = arith.cmpi eq, %58, %117 : vector<4x37x1xi32>
    %c7 = arith.constant 7 : index
    %c0_28 = arith.constant 0 : index
    %119 = vector.load %arg2[%c7, %c0_28] : memref<13x128xf32, #tpu.memory_space<vmem>>, vector<1x128xf32>
    %120 = vector.shape_cast %119 : vector<1x128xf32> to vector<128xf32>
    %121 = vector.shape_cast %118 : vector<4x37x1xi1> to vector<4x37x1xi1>
    %122 = vector.broadcast %121 : vector<4x37x1xi1> to vector<4x37x128xi1>
    %123 = vector.shape_cast %120 : vector<128xf32> to vector<1x1x128xf32>
    %124 = vector.broadcast %123 : vector<1x1x128xf32> to vector<4x37x128xf32>
    %125 = arith.select %122, %124, %116 : vector<4x37x128xi1>, vector<4x37x128xf32>
    %c8_i32 = arith.constant 8 : i32
    %126 = vector.broadcast %c8_i32 : i32 to vector<4x37x1xi32>
    %127 = arith.cmpi eq, %58, %126 : vector<4x37x1xi32>
    %c8 = arith.constant 8 : index
    %c0_29 = arith.constant 0 : index
    %128 = vector.load %arg2[%c8, %c0_29] : memref<13x128xf32, #tpu.memory_space<vmem>>, vector<1x128xf32>
    %129 = vector.shape_cast %128 : vector<1x128xf32> to vector<128xf32>
    %130 = vector.shape_cast %127 : vector<4x37x1xi1> to vector<4x37x1xi1>
    %131 = vector.broadcast %130 : vector<4x37x1xi1> to vector<4x37x128xi1>
    %132 = vector.shape_cast %129 : vector<128xf32> to vector<1x1x128xf32>
    %133 = vector.broadcast %132 : vector<1x1x128xf32> to vector<4x37x128xf32>
    %134 = arith.select %131, %133, %125 : vector<4x37x128xi1>, vector<4x37x128xf32>
    %c9_i32_30 = arith.constant 9 : i32
    %135 = vector.broadcast %c9_i32_30 : i32 to vector<4x37x1xi32>
    %136 = arith.cmpi eq, %58, %135 : vector<4x37x1xi32>
    %c9 = arith.constant 9 : index
    %c0_31 = arith.constant 0 : index
    %137 = vector.load %arg2[%c9, %c0_31] : memref<13x128xf32, #tpu.memory_space<vmem>>, vector<1x128xf32>
    %138 = vector.shape_cast %137 : vector<1x128xf32> to vector<128xf32>
    %139 = vector.shape_cast %136 : vector<4x37x1xi1> to vector<4x37x1xi1>
    %140 = vector.broadcast %139 : vector<4x37x1xi1> to vector<4x37x128xi1>
    %141 = vector.shape_cast %138 : vector<128xf32> to vector<1x1x128xf32>
    %142 = vector.broadcast %141 : vector<1x1x128xf32> to vector<4x37x128xf32>
    %143 = arith.select %140, %142, %134 : vector<4x37x128xi1>, vector<4x37x128xf32>
    %c10_i32_32 = arith.constant 10 : i32
    %144 = vector.broadcast %c10_i32_32 : i32 to vector<4x37x1xi32>
    %145 = arith.cmpi eq, %58, %144 : vector<4x37x1xi32>
    %c10 = arith.constant 10 : index
    %c0_33 = arith.constant 0 : index
    %146 = vector.load %arg2[%c10, %c0_33] : memref<13x128xf32, #tpu.memory_space<vmem>>, vector<1x128xf32>
    %147 = vector.shape_cast %146 : vector<1x128xf32> to vector<128xf32>
    %148 = vector.shape_cast %145 : vector<4x37x1xi1> to vector<4x37x1xi1>
    %149 = vector.broadcast %148 : vector<4x37x1xi1> to vector<4x37x128xi1>
    %150 = vector.shape_cast %147 : vector<128xf32> to vector<1x1x128xf32>
    %151 = vector.broadcast %150 : vector<1x1x128xf32> to vector<4x37x128xf32>
    %152 = arith.select %149, %151, %143 : vector<4x37x128xi1>, vector<4x37x128xf32>
    %c11_i32_34 = arith.constant 11 : i32
    %153 = vector.broadcast %c11_i32_34 : i32 to vector<4x37x1xi32>
    %154 = arith.cmpi eq, %58, %153 : vector<4x37x1xi32>
    %c11 = arith.constant 11 : index
    %c0_35 = arith.constant 0 : index
    %155 = vector.load %arg2[%c11, %c0_35] : memref<13x128xf32, #tpu.memory_space<vmem>>, vector<1x128xf32>
    %156 = vector.shape_cast %155 : vector<1x128xf32> to vector<128xf32>
    %157 = vector.shape_cast %154 : vector<4x37x1xi1> to vector<4x37x1xi1>
    %158 = vector.broadcast %157 : vector<4x37x1xi1> to vector<4x37x128xi1>
    %159 = vector.shape_cast %156 : vector<128xf32> to vector<1x1x128xf32>
    %160 = vector.broadcast %159 : vector<1x1x128xf32> to vector<4x37x128xf32>
    %161 = arith.select %158, %160, %152 : vector<4x37x128xi1>, vector<4x37x128xf32>
    %c12_i32_36 = arith.constant 12 : i32
    %162 = vector.broadcast %c12_i32_36 : i32 to vector<4x37x1xi32>
    %163 = arith.cmpi eq, %58, %162 : vector<4x37x1xi32>
    %c12 = arith.constant 12 : index
    %c0_37 = arith.constant 0 : index
    %164 = vector.load %arg2[%c12, %c0_37] : memref<13x128xf32, #tpu.memory_space<vmem>>, vector<1x128xf32>
    %165 = vector.shape_cast %164 : vector<1x128xf32> to vector<128xf32>
    %166 = vector.shape_cast %163 : vector<4x37x1xi1> to vector<4x37x1xi1>
    %167 = vector.broadcast %166 : vector<4x37x1xi1> to vector<4x37x128xi1>
    %168 = vector.shape_cast %165 : vector<128xf32> to vector<1x1x128xf32>
    %169 = vector.broadcast %168 : vector<1x1x128xf32> to vector<4x37x128xf32>
    %170 = arith.select %167, %169, %161 : vector<4x37x128xi1>, vector<4x37x128xf32>
    %c0_38 = arith.constant 0 : index
    %c0_39 = arith.constant 0 : index
    %c0_40 = arith.constant 0 : index
    %171 = vector.load %arg3[%c0_38, %c0_39, %c0_40] : memref<4x37x128xf32, #tpu.memory_space<vmem>>, vector<4x37x128xf32>
    tpu.vector_store %arg3[%c0_38, %c0_39, %c0_40], %170 {strides = array<i32>} : memref<4x37x128xf32, #tpu.memory_space<vmem>>, vector<4x37x128xf32>,
    return
  }
  func.func @transform_0(%arg0: i32) -> (i32, i32, i32) {
    %c0_i32 = arith.constant 0 : i32
    %c0_i32_0 = arith.constant 0 : i32
    %c0_i32_1 = arith.constant 0 : i32
    return %arg0, %c0_i32, %c0_i32_0 : i32, i32, i32
  }
  func.func @transform_1(%arg0: i32) -> (i32, i32) {
    %c0_i32 = arith.constant 0 : i32
    %c0_i32_0 = arith.constant 0 : i32
    %c0_i32_1 = arith.constant 0 : i32
    return %c0_i32, %c0_i32_0 : i32, i32
  }
  func.func @transform_2(%arg0: i32) -> (i32, i32, i32) {
    %c0_i32 = arith.constant 0 : i32
    %c0_i32_0 = arith.constant 0 : i32
    %c0_i32_1 = arith.constant 0 : i32
    return %arg0, %c0_i32, %c0_i32_0 : i32, i32, i32
  }
}

</mosaic_0001>

<llo_original>
// kernel: tpu_custom_call.1
$region0: #{tpu_custom_call.1}
  #allocation0 [shape = 'u32[]', space=smem, size = 0x4, offset = 0x4, fixed_abs, tag = 'smem constant byte address 0x4 - core index']
  #allocation1 [shape = 'u32[144,128]{1,0:T(1,128)}', space=vmem, size = 0x12000, scoped, tag = 'internal scratch']
  %s0 = inlined_call_operand.hbm [shape: s32[8,1,37], index: 0, kind: input, shape index: {}]
  %s1 = inlined_call_operand.hbm [shape: f32[13,128], index: 1, kind: input, shape index: {}]
  %s2 = inlined_call_operand.vmem [shape: f32[8,37,128], index: 2, kind: output, shape index: {}]
  %s3 = sld [smem:[#allocation0]]
  $region49: #{tpu_custom_call.1} parent=0
    _
  %s5 = ssub.s32 1, %s3
  %s6 = scalar_select 0, %s5, %s3
  $region1: #{tpu_custom_call.1} parent=0
    #allocation2 [shape = 'u8[4096]{0}', space=vmem, size = 0x1000, scoped, tag = 'input window, operand 0']
    #allocation3 [shape = 's32[2]{0}', space=sflag, size = 0x8, scoped, tag = 'scoped memory for tpu_custom_call.1']
    #allocation4 [shape = 'u8[8192]{0}', space=vmem, size = 0x2000, scoped, tag = 'input window, operand 1, single buffered']
    #allocation5 [shape = 's32[1]{0}', space=sflag, size = 0x4, scoped, tag = 'scoped memory for tpu_custom_call.1']
    %7 = vsyncpa [#allocation3], 0
    %s8 = scalar_lea.sflag [#allocation3], 1
    %9 = vsyncpa %s8, 0
    %10 = vsyncpa [#allocation5], 0
    loop: start=0, step=1, limit=4
    $region2: #{tpu_custom_call.1} parent=1 // loop_pre_header
      _
    $region3: #{tpu_custom_call.1} parent=1 // loop_header
      %s12 = sphi 0, %s16
      %p13 = scmp.ge.s32.totalorder %s12, 4
      %s22 = sphi 0, %s24
      %s25 = sphi 0, %s22
      %s26 = sphi 0, %s25
      %s42 = sphi 0, %s26
      %s46 = sphi 0, %s46
      %s48 = sphi 0, %s46
      %s49 = sphi 0, %s48
      %s63 = sphi 0, %s49
      %s69 = sphi 0, %s71
      %s72 = sphi 0, %s69
      %s73 = sphi 0, %s72
      %s89 = sphi 0, %s73
    $region4: #{tpu_custom_call.1} parent=1 // loop_header_branch
      %15 = sbr.rel (%p13) target = $region8
    $region5: #{tpu_custom_call.1} parent=1 // loop_body
      %s17 = ssub.s32 %s12, 1
      %s18 = ssub.s32 %s12, 2
      %s19 = sadd.s32 %s12, 1
      %s20 = ssub.s32 %s12, %s19
      %p21 = scmp.eq.s32.totalorder %s20, 0
      %s23 = sadd.s32 %s22, 1
      %s24 = scalar_select %p21, %s22, %s23
      %p27 = pneg %p21
      %p28 = scmp.eq.s32.totalorder %s12, 1
      %p29 = por %p27, %p28
      %p30 = scmp.ne.s32.totalorder %s22, %s25
      %p31 = scmp.eq.s32.totalorder %s12, 0
      %p32 = por %p30, %p31
      %p33 = scmp.ne.s32.totalorder %s22, %s25
      %p34 = scmp.eq.s32.totalorder %s17, 1
      %p35 = por %p33, %p34
      %p36 = scmp.ne.s32.totalorder %s25, %s26
      %p37 = scmp.eq.s32.totalorder %s17, 0
      %p38 = por %p36, %p37
      %p39 = scmp.ne.s32.totalorder %s25, %s26
      %p40 = scmp.eq.s32.totalorder %s18, 1
      %p41 = por %p39, %p40
      %p43 = scmp.ne.s32.totalorder %s26, %s42
      %p44 = scmp.eq.s32.totalorder %s18, 0
      %p45 = por %p43, %p44
      %s47 = sadd.s32 %s46, 1
      %p50 = scmp.eq.s32.totalorder %s12, 1
      %p51 = scmp.ne.s32.totalorder %s46, %s48
      %p52 = scmp.eq.s32.totalorder %s12, 0
      %p53 = por %p51, %p52
      %p54 = scmp.ne.s32.totalorder %s46, %s48
      %p55 = scmp.eq.s32.totalorder %s17, 1
      %p56 = por %p54, %p55
      %p57 = scmp.ne.s32.totalorder %s48, %s49
      %p58 = scmp.eq.s32.totalorder %s17, 0
      %p59 = por %p57, %p58
      %p60 = scmp.ne.s32.totalorder %s48, %s49
      %p61 = scmp.eq.s32.totalorder %s18, 1
      %p62 = por %p60, %p61
      %p64 = scmp.ne.s32.totalorder %s49, %s63
      %p65 = scmp.eq.s32.totalorder %s18, 0
      %p66 = por %p64, %p65
      %s67 = ssub.s32 %s12, %s19
      %p68 = scmp.eq.s32.totalorder %s67, 0
      %s70 = sadd.s32 %s69, 1
      %s71 = scalar_select %p68, %s69, %s70
      %p74 = pneg %p68
      %p75 = scmp.eq.s32.totalorder %s12, 1
      %p76 = por %p74, %p75
      %p77 = scmp.ne.s32.totalorder %s69, %s72
      %p78 = scmp.eq.s32.totalorder %s12, 0
      %p79 = por %p77, %p78
      %p80 = scmp.ne.s32.totalorder %s69, %s72
      %p81 = scmp.eq.s32.totalorder %s17, 1
      %p82 = por %p80, %p81
      %p83 = scmp.ne.s32.totalorder %s72, %s73
      %p84 = scmp.eq.s32.totalorder %s17, 0
      %p85 = por %p83, %p84
      %p86 = scmp.ne.s32.totalorder %s72, %s73
      %p87 = scmp.eq.s32.totalorder %s18, 1
      %p88 = por %p86, %p87
      %p90 = scmp.ne.s32.totalorder %s73, %s89
      %p91 = scmp.eq.s32.totalorder %s18, 0
      %p92 = por %p90, %p91
      %p93 = scmp.le.s32.totalorder 1, %s12
      %p94 = scmp.lt.s32.totalorder %s12, 3
      %p95 = pnand %p93, %p94
      %p96 = pneg %p95
      // Predicated region
      $region9: #{tpu_custom_call.1} parent=5 // pred_check
        _
      $region10: #{tpu_custom_call.1} parent=5 // pred_check_branch
        %98 = sbr.rel (%p95) target = $region12
      $region11: #{tpu_custom_call.1} parent=5 // pred_region
        %s99 = ssub.s32 %s12, 1
        // Predicated region
        $region13: #{tpu_custom_call.1} parent=11 // pred_check
          %p100 = pneg %p59
        $region14: #{tpu_custom_call.1} parent=11 // pred_check_branch
          %102 = sbr.rel (%p100) target = $region16
        $region15: #{tpu_custom_call.1} parent=11 // pred_region
          %s104 = ssub.s32 256, 256
          %105 = vsyncadd [#allocation5], %s104
          %s106 = sshll.u32 [#allocation4], 4
          %s107 = int_to_ptr.vmem [resolvable:$true] %s106
          %112 = dma.hbm_to_vmem [thread:$0]  %s1, 256, %s107, [#allocation5], 128, 128, 8
        $region16: #{tpu_custom_call.1} parent=11 // pred_fallthru
          _
      $region12: #{tpu_custom_call.1} parent=5 // pred_fallthru
        _
      %p113 = scmp.lt.s32.totalorder %s12, 2
      // Predicated region
      $region17: #{tpu_custom_call.1} parent=5 // pred_check
        %p114 = pneg %p113
      $region18: #{tpu_custom_call.1} parent=5 // pred_check_branch
        %116 = sbr.rel (%p114) target = $region20
      $region19: #{tpu_custom_call.1} parent=5 // pred_region
        // Predicated region
        $region21: #{tpu_custom_call.1} parent=19 // pred_check
          %p117 = pneg %p32
        $region22: #{tpu_custom_call.1} parent=19 // pred_check_branch
          %119 = sbr.rel (%p117) target = $region24
        $region23: #{tpu_custom_call.1} parent=19 // pred_region
          %s120 = sand.u32 %s22, 1
          %s121 = scalar_lea.sflag [#allocation3], %s120
          %s122 = sand.u32 %s22, 1
          %s123 = smul.addr %s122, 4
          %s124 = scalar_lea.vmem [#allocation2], %s123
          %s125 = smul.u32 4, %s12
          %s127 = ssub.s32 64, 64
          %128 = vsyncadd %s121, %s127
          %s129 = smul.addr %s125, 16
          %s130 = scalar_lea.hbm %s0, %s129
          %s131 = sshll.u32 %s124, 4
          %s132 = int_to_ptr.vmem [resolvable:$true] %s131
          %137 = dma.hbm_to_vmem [thread:$0]  %s130, 64, %s132, %s121, 16, 16, 1
        $region24: #{tpu_custom_call.1} parent=19 // pred_fallthru
          _
      $region20: #{tpu_custom_call.1} parent=5 // pred_fallthru
        _
      %p138 = scmp.le.s32.totalorder 1, %s12
      %p139 = scmp.lt.s32.totalorder %s12, 3
      %p140 = pnand %p138, %p139
      %p141 = pneg %p140
      // Predicated region
      $region25: #{tpu_custom_call.1} parent=5 // pred_check
        _
      $region26: #{tpu_custom_call.1} parent=5 // pred_check_branch
        %143 = sbr.rel (%p140) target = $region28
      $region27: #{tpu_custom_call.1} parent=5 // pred_region
        %s144 = ssub.s32 %s12, 1
        %s145 = sand.u32 %s25, 1
        %s146 = scalar_lea.sflag [#allocation3], %s145
        %s147 = sand.u32 %s25, 1
        %s148 = smul.addr %s147, 4
        %s149 = scalar_lea.vmem [#allocation2], %s148
        // Predicated region
        $region29: #{tpu_custom_call.1} parent=27 // pred_check
          %p150 = pneg %p38
        $region30: #{tpu_custom_call.1} parent=27 // pred_check_branch
          %152 = sbr.rel (%p150) target = $region32
        $region31: #{tpu_custom_call.1} parent=27 // pred_region
          %153 = dma.done %s146, 64
        $region32: #{tpu_custom_call.1} parent=27 // pred_fallthru
          _
        // Predicated region
        $region33: #{tpu_custom_call.1} parent=27 // pred_check
          %p154 = pneg %p59
        $region34: #{tpu_custom_call.1} parent=27 // pred_check_branch
          %156 = sbr.rel (%p154) target = $region36
        $region35: #{tpu_custom_call.1} parent=27 // pred_region
          %157 = dma.done [#allocation5], 256
        $region36: #{tpu_custom_call.1} parent=27 // pred_fallthru
          _
        %s158 = sand.u32 %s25, 1
        %s159 = scalar_lea.sflag [#allocation3], %s158
        %s160 = sand.u32 %s25, 1
        %s161 = smul.addr %s160, 4
        %s162 = scalar_lea.vmem [#allocation2], %s161
        %p163 = pneg %p38
        %p164 = pneg %p35
        %p165 = pneg %p59
        %p166 = pneg %p56
        %p167 = pneg %p85
        %p168 = pneg %p82
        %s169 = smul.u32 4, %s17
        %p170 = scmp.lt.s32.totalorder %s169, 7
        %s171 = scalar_select %p170, %s169, 7
        %s172 = smul.addr %s171, 5
        %s173 = smul.addr %s172, 8
        %s174 = scalar_lea.vmem %s2, %s173
        %s175 = smul.u32 4, %s17
        %s176 = smul.u32 4, %s17
        %p177 = scmp.lt.s32.totalorder %s176, 7
        %s178 = scalar_select %p177, %s176, 7
        %s179 = smul.addr %s178, 5
        %s180 = smul.addr %s179, 8
        %s181 = scalar_lea.vmem %s2, %s180
        %s182 = smul.u32 4, %s17
        %v183 = vld [vmem:[%s149] sm:$0x1]
        %v184 = vld [vmem:[%s149 + $0x1] sm:$0x1]
        %v185 = vld [vmem:[%s149 + $0x2] sm:$0x1]
        %v186 = vld [vmem:[%s149 + $0x3] sm:$0x1]
        %v187 = vlaneseq
        %v188 = vand.u32 %v187, 127
        %vm189 = vcmp.eq.s32.totalorder %v183, 3
        %vm190 = vcmp.eq.s32.totalorder %v184, 3
        %vm191 = vcmp.eq.s32.totalorder %v185, 3
        %vm192 = vcmp.eq.s32.totalorder %v186, 3
        %vm193 = vcmp.eq.s32.totalorder %v183, 14
        %vm194 = vcmp.eq.s32.totalorder %v184, 14
        %vm195 = vcmp.eq.s32.totalorder %v185, 14
        %vm196 = vcmp.eq.s32.totalorder %v186, 14
        %vm197 = vcmp.eq.s32.totalorder %v183, 12
        %vm198 = vcmp.eq.s32.totalorder %v184, 12
        %vm199 = vcmp.eq.s32.totalorder %v185, 12
        %vm200 = vcmp.eq.s32.totalorder %v186, 12
        %v201 = vsel %vm197, 3, 1
        %v202 = vsel %vm198, 3, 1
        %v203 = vsel %vm199, 3, 1
        %v204 = vsel %vm200, 3, 1
        %v205 = vsel %vm193, 4, %v201
        %v206 = vsel %vm194, 4, %v202
        %v207 = vsel %vm195, 4, %v203
        %v208 = vsel %vm196, 4, %v204
        %v209 = vsel %vm189, 2, %v205
        %v210 = vsel %vm190, 2, %v206
        %v211 = vsel %vm191, 2, %v207
        %v212 = vsel %vm192, 2, %v208
        %vm213 = vcmp.gt.s32.totalorder %v183, 0
        %v214 = vsel %vm213, %v183, 0
        %vm215 = vcmp.gt.s32.totalorder %v184, 0
        %v216 = vsel %vm215, %v184, 0
        %vm217 = vcmp.gt.s32.totalorder %v185, 0
        %v218 = vsel %vm217, %v185, 0
        %vm219 = vcmp.gt.s32.totalorder %v186, 0
        %v220 = vsel %vm219, %v186, 0
        %vm221 = vcmp.lt.s32.totalorder %v214, 4
        %v222 = vsel %vm221, %v214, 4
        %vm223 = vcmp.lt.s32.totalorder %v216, 4
        %v224 = vsel %vm223, %v216, 4
        %vm225 = vcmp.lt.s32.totalorder %v218, 4
        %v226 = vsel %vm225, %v218, 4
        %vm227 = vcmp.lt.s32.totalorder %v220, 4
        %v228 = vsel %vm227, %v220, 4
        %v229 = vadd.s32 %v222, 5
        %v230 = vadd.s32 %v224, 5
        %v231 = vadd.s32 %v226, 5
        %v232 = vadd.s32 %v228, 5
        %vm233 = vcmp.eq.s32.totalorder %v188, 0
        %v234 = vsel %vm233, 0, 1
        %vm235 = vcmp.ge.s32.totalorder %v188, 1
        %vm236 = vcmp.lt.s32.totalorder %v188, 9
        %vm237 = vmand %vm235, %vm236
        %v238 = vcombine.low %v209, %v210
        %v239 = vcombine.low %v211, %v212
        %v241 = vunpack.c.l.s4 1966171168
        %v242 = vunpack.c.0.s8 %v241
        %v243 = vlaneseq
        %v244 = vshrl.u32 %v243, 7
        %v245 = vsub.s32 %v242, %v244
        %v246 = vrot.slane %v238, %v245
        %v248 = vunpack.c.l.s4 1966171168
        %v249 = vunpack.c.0.s8 %v248
        %v250 = vlaneseq
        %v251 = vshrl.u32 %v250, 7
        %v252 = vsub.s32 %v249, %v251
        %v253 = vrot.slane %v239, %v252
        %v254 = vcombine.low %v246, %v253
        %v256 = vunpack.c.l.s4 1966171168
        %v257 = vunpack.c.0.s8 %v256
        %v258 = vlaneseq
        %v259 = vshrl.u32 %v258, 7
        %v260 = vsub.s32 %v257, %v259
        %v261 = vrot.slane %v254, %v260
        %v262 = vsel %vm237, %v261, %v234
        %vm263 = vcmp.ge.s32.totalorder %v188, 9
        %vm264 = vcmp.lt.s32.totalorder %v188, 25
        %vm265 = vmand %vm263, %vm264
        %v266 = vcombine.low %v229, %v230
        %v267 = vcombine.low %v231, %v232
        %v269 = vunpack.c.l.s4 1966171168
        %v270 = vunpack.c.0.s8 %v269
        %v271 = vlaneseq
        %v272 = vshrl.u32 %v271, 7
        %v273 = vsub.s32 %v270, %v272
        %v274 = vrot.slane %v266, %v273
        %v276 = vunpack.c.l.s4 1966171168
        %v277 = vunpack.c.0.s8 %v276
        %v278 = vlaneseq
        %v279 = vshrl.u32 %v278, 7
        %v280 = vsub.s32 %v277, %v279
        %v281 = vrot.slane %v267, %v280
        %v282 = vcombine.low %v274, %v281
        %v284 = vunpack.c.l.s4 1966171168
        %v285 = vunpack.c.0.s8 %v284
        %v286 = vlaneseq
        %v287 = vshrl.u32 %v286, 7
        %v288 = vsub.s32 %v285, %v287
        %v289 = vrot.slane %v282, %v288
        %v290 = vsel %vm265, %v289, %v262
        %vm291 = vcmp.ge.s32.totalorder %v188, 25
        %vm292 = vcmp.lt.s32.totalorder %v188, 29
        %vm293 = vmand %vm291, %vm292
        %v294 = vsel %vm293, 10, %v290
        %v295 = vsub.s32 %v188, 29
        %v296 = vand.u32 %v295, 1
        %vm297 = vcmp.eq.s32.totalorder %v296, 0
        %vm298 = vcmp.ge.s32.totalorder %v188, 29
        %v299 = vsel %vm297, 11, 12
        %v300 = vsel %vm298, %v299, %v294
        %v301 = vlaneseq
        %v302 = vshrl.u32 %v301, 7
        %v303 = vsub.s32 0, %v302
        %v304 = vrot.slane %v300, %v303
        %306 = vbcast.lane.b32.xlu0 %v304, 256
        %v307 = vpop.permute.xlu0 %306
        %s309 = sor.u32 256, 8
        %310 = vbcast.lane.b32.xlu0 %v304, %s309
        %v311 = vpop.permute.xlu0 %310
        %s313 = sor.u32 256, 16
        %314 = vbcast.lane.b32.xlu0 %v304, %s313
        %v315 = vpop.permute.xlu0 %314
        %s317 = sor.u32 256, 24
        %318 = vbcast.lane.b32.xlu0 %v304, %s317
        %v319 = vpop.permute.xlu0 %318
        %s321 = sor.u32 256, 32
        %322 = vbcast.lane.b32.xlu0 %v304, %s321
        %v323 = vpop.permute.xlu0 %322
        %v324 = vlaneseq
        %v325 = vshrl.u32 %v324, 7
        %v326 = vsub.s32 1, %v325
        %v327 = vrot.slane %v300, %v326
        %329 = vbcast.lane.b32.xlu0 %v327, 256
        %v330 = vpop.permute.xlu0 %329
        %s332 = sor.u32 256, 8
        %333 = vbcast.lane.b32.xlu0 %v327, %s332
        %v334 = vpop.permute.xlu0 %333
        %s336 = sor.u32 256, 16
        %337 = vbcast.lane.b32.xlu0 %v327, %s336
        %v338 = vpop.permute.xlu0 %337
        %s340 = sor.u32 256, 24
        %341 = vbcast.lane.b32.xlu0 %v327, %s340
        %v342 = vpop.permute.xlu0 %341
        %s344 = sor.u32 256, 32
        %345 = vbcast.lane.b32.xlu0 %v327, %s344
        %v346 = vpop.permute.xlu0 %345
        %v347 = vlaneseq
        %v348 = vshrl.u32 %v347, 7
        %v349 = vsub.s32 2, %v348
        %v350 = vrot.slane %v300, %v349
        %352 = vbcast.lane.b32.xlu0 %v350, 256
        %v353 = vpop.permute.xlu0 %352
        %s355 = sor.u32 256, 8
        %356 = vbcast.lane.b32.xlu0 %v350, %s355
        %v357 = vpop.permute.xlu0 %356
        %s359 = sor.u32 256, 16
        %360 = vbcast.lane.b32.xlu0 %v350, %s359
        %v361 = vpop.permute.xlu0 %360
        %s363 = sor.u32 256, 24
        %364 = vbcast.lane.b32.xlu0 %v350, %s363
        %v365 = vpop.permute.xlu0 %364
        %s367 = sor.u32 256, 32
        %368 = vbcast.lane.b32.xlu0 %v350, %s367
        %v369 = vpop.permute.xlu0 %368
        %v370 = vlaneseq
        %v371 = vshrl.u32 %v370, 7
        %v372 = vsub.s32 3, %v371
        %v373 = vrot.slane %v300, %v372
        %375 = vbcast.lane.b32.xlu0 %v373, 256
        %v376 = vpop.permute.xlu0 %375
        %s378 = sor.u32 256, 8
        %379 = vbcast.lane.b32.xlu0 %v373, %s378
        %v380 = vpop.permute.xlu0 %379
        %s382 = sor.u32 256, 16
        %383 = vbcast.lane.b32.xlu0 %v373, %s382
        %v384 = vpop.permute.xlu0 %383
        %s386 = sor.u32 256, 24
        %387 = vbcast.lane.b32.xlu0 %v373, %s386
        %v388 = vpop.permute.xlu0 %387
        %s390 = sor.u32 256, 32
        %391 = vbcast.lane.b32.xlu0 %v373, %s390
        %v392 = vpop.permute.xlu0 %391
        %v393 = vld [vmem:[#allocation4] sm:$0x1]
        %v394 = vlaneseq
        %v395 = vshrl.u32 %v394, 7
        %v396 = vsub.s32 0, %v395
        %v397 = vrot.slane %v393, %v396
        %vm398 = vcmp.eq.s32.totalorder %v307, 1
        %vm399 = vcmp.eq.s32.totalorder %v311, 1
        %vm400 = vcmp.eq.s32.totalorder %v315, 1
        %vm401 = vcmp.eq.s32.totalorder %v319, 1
        %vm402 = vcmp.eq.s32.totalorder %v323, 1
        %vm403 = vcmp.eq.s32.totalorder %v330, 1
        %vm404 = vcmp.eq.s32.totalorder %v334, 1
        %vm405 = vcmp.eq.s32.totalorder %v338, 1
        %vm406 = vcmp.eq.s32.totalorder %v342, 1
        %vm407 = vcmp.eq.s32.totalorder %v346, 1
        %vm408 = vcmp.eq.s32.totalorder %v353, 1
        %vm409 = vcmp.eq.s32.totalorder %v357, 1
        %vm410 = vcmp.eq.s32.totalorder %v361, 1
        %vm411 = vcmp.eq.s32.totalorder %v365, 1
        %vm412 = vcmp.eq.s32.totalorder %v369, 1
        %vm413 = vcmp.eq.s32.totalorder %v376, 1
        %vm414 = vcmp.eq.s32.totalorder %v380, 1
        %vm415 = vcmp.eq.s32.totalorder %v384, 1
        %vm416 = vcmp.eq.s32.totalorder %v388, 1
        %vm417 = vcmp.eq.s32.totalorder %v392, 1
        %v418 = vld [vmem:[#allocation4 + $0x1] sm:$0x1]
        %v419 = vsel %vm398, 1, 0
        %v420 = vsel %vm399, 1, 0
        %v421 = vsel %vm400, 1, 0
        %v422 = vsel %vm401, 1, 0
        %v423 = vsel %vm402, 1, 0
        %v424 = vsel %vm403, 1, 0
        %v425 = vsel %vm404, 1, 0
        %v426 = vsel %vm405, 1, 0
        %v427 = vsel %vm406, 1, 0
        %v428 = vsel %vm407, 1, 0
        %v429 = vsel %vm408, 1, 0
        %v430 = vsel %vm409, 1, 0
        %v431 = vsel %vm410, 1, 0
        %v432 = vsel %vm411, 1, 0
        %v433 = vsel %vm412, 1, 0
        %v434 = vsel %vm413, 1, 0
        %v435 = vsel %vm414, 1, 0
        %v436 = vsel %vm415, 1, 0
        %v437 = vsel %vm416, 1, 0
        %v438 = vsel %vm417, 1, 0
        %vm439 = vcmp.eq.s32.totalorder %v419, 1
        %vm440 = vcmp.eq.s32.totalorder %v420, 1
        %vm441 = vcmp.eq.s32.totalorder %v421, 1
        %vm442 = vcmp.eq.s32.totalorder %v422, 1
        %vm443 = vcmp.eq.s32.totalorder %v423, 1
        %vm444 = vcmp.eq.s32.totalorder %v424, 1
        %vm445 = vcmp.eq.s32.totalorder %v425, 1
        %vm446 = vcmp.eq.s32.totalorder %v426, 1
        %vm447 = vcmp.eq.s32.totalorder %v427, 1
        %vm448 = vcmp.eq.s32.totalorder %v428, 1
        %vm449 = vcmp.eq.s32.totalorder %v429, 1
        %vm450 = vcmp.eq.s32.totalorder %v430, 1
        %vm451 = vcmp.eq.s32.totalorder %v431, 1
        %vm452 = vcmp.eq.s32.totalorder %v432, 1
        %vm453 = vcmp.eq.s32.totalorder %v433, 1
        %vm454 = vcmp.eq.s32.totalorder %v434, 1
        %vm455 = vcmp.eq.s32.totalorder %v435, 1
        %vm456 = vcmp.eq.s32.totalorder %v436, 1
        %vm457 = vcmp.eq.s32.totalorder %v437, 1
        %vm458 = vcmp.eq.s32.totalorder %v438, 1
        %v459 = vlaneseq
        %v460 = vshrl.u32 %v459, 7
        %v461 = vsub.s32 0, %v460
        %v462 = vrot.slane %v418, %v461
        %v463 = vsel %vm439, %v462, %v397
        %v464 = vsel %vm440, %v462, %v397
        %v465 = vsel %vm441, %v462, %v397
        %v466 = vsel %vm442, %v462, %v397
        %v467 = vsel %vm443, %v462, %v397
        %v468 = vsel %vm444, %v462, %v397
        %v469 = vsel %vm445, %v462, %v397
        %v470 = vsel %vm446, %v462, %v397
        %v471 = vsel %vm447, %v462, %v397
        %v472 = vsel %vm448, %v462, %v397
        %v473 = vsel %vm449, %v462, %v397
        %v474 = vsel %vm450, %v462, %v397
        %v475 = vsel %vm451, %v462, %v397
        %v476 = vsel %vm452, %v462, %v397
        %v477 = vsel %vm453, %v462, %v397
        %v478 = vsel %vm454, %v462, %v397
        %v479 = vsel %vm455, %v462, %v397
        %v480 = vsel %vm456, %v462, %v397
        %v481 = vsel %vm457, %v462, %v397
        %v482 = vsel %vm458, %v462, %v397
        %vm483 = vcmp.eq.s32.totalorder %v307, 2
        %vm484 = vcmp.eq.s32.totalorder %v311, 2
        %vm485 = vcmp.eq.s32.totalorder %v315, 2
        %vm486 = vcmp.eq.s32.totalorder %v319, 2
        %vm487 = vcmp.eq.s32.totalorder %v323, 2
        %vm488 = vcmp.eq.s32.totalorder %v330, 2
        %vm489 = vcmp.eq.s32.totalorder %v334, 2
        %vm490 = vcmp.eq.s32.totalorder %v338, 2
        %vm491 = vcmp.eq.s32.totalorder %v342, 2
        %vm492 = vcmp.eq.s32.totalorder %v346, 2
        %vm493 = vcmp.eq.s32.totalorder %v353, 2
        %vm494 = vcmp.eq.s32.totalorder %v357, 2
        %vm495 = vcmp.eq.s32.totalorder %v361, 2
        %vm496 = vcmp.eq.s32.totalorder %v365, 2
        %vm497 = vcmp.eq.s32.totalorder %v369, 2
        %vm498 = vcmp.eq.s32.totalorder %v376, 2
        %vm499 = vcmp.eq.s32.totalorder %v380, 2
        %vm500 = vcmp.eq.s32.totalorder %v384, 2
        %vm501 = vcmp.eq.s32.totalorder %v388, 2
        %vm502 = vcmp.eq.s32.totalorder %v392, 2
        %v503 = vld [vmem:[#allocation4 + $0x2] sm:$0x1]
        %v504 = vsel %vm483, 1, 0
        %v505 = vsel %vm484, 1, 0
        %v506 = vsel %vm485, 1, 0
        %v507 = vsel %vm486, 1, 0
        %v508 = vsel %vm487, 1, 0
        %v509 = vsel %vm488, 1, 0
        %v510 = vsel %vm489, 1, 0
        %v511 = vsel %vm490, 1, 0
        %v512 = vsel %vm491, 1, 0
        %v513 = vsel %vm492, 1, 0
        %v514 = vsel %vm493, 1, 0
        %v515 = vsel %vm494, 1, 0
        %v516 = vsel %vm495, 1, 0
        %v517 = vsel %vm496, 1, 0
        %v518 = vsel %vm497, 1, 0
        %v519 = vsel %vm498, 1, 0
        %v520 = vsel %vm499, 1, 0
        %v521 = vsel %vm500, 1, 0
        %v522 = vsel %vm501, 1, 0
        %v523 = vsel %vm502, 1, 0
        %vm524 = vcmp.eq.s32.totalorder %v504, 1
        %vm525 = vcmp.eq.s32.totalorder %v505, 1
        %vm526 = vcmp.eq.s32.totalorder %v506, 1
        %vm527 = vcmp.eq.s32.totalorder %v507, 1
        %vm528 = vcmp.eq.s32.totalorder %v508, 1
        %vm529 = vcmp.eq.s32.totalorder %v509, 1
        %vm530 = vcmp.eq.s32.totalorder %v510, 1
        %vm531 = vcmp.eq.s32.totalorder %v511, 1
        %vm532 = vcmp.eq.s32.totalorder %v512, 1
        %vm533 = vcmp.eq.s32.totalorder %v513, 1
        %vm534 = vcmp.eq.s32.totalorder %v514, 1
        %vm535 = vcmp.eq.s32.totalorder %v515, 1
        %vm536 = vcmp.eq.s32.totalorder %v516, 1
        %vm537 = vcmp.eq.s32.totalorder %v517, 1
        %vm538 = vcmp.eq.s32.totalorder %v518, 1
        %vm539 = vcmp.eq.s32.totalorder %v519, 1
        %vm540 = vcmp.eq.s32.totalorder %v520, 1
        %vm541 = vcmp.eq.s32.totalorder %v521, 1
        %vm542 = vcmp.eq.s32.totalorder %v522, 1
        %vm543 = vcmp.eq.s32.totalorder %v523, 1
        %v544 = vlaneseq
        %v545 = vshrl.u32 %v544, 7
        %v546 = vsub.s32 0, %v545
        %v547 = vrot.slane %v503, %v546
        %v548 = vsel %vm524, %v547, %v463
        %v549 = vsel %vm525, %v547, %v464
        %v550 = vsel %vm526, %v547, %v465
        %v551 = vsel %vm527, %v547, %v466
        %v552 = vsel %vm528, %v547, %v467
        %v553 = vsel %vm529, %v547, %v468
        %v554 = vsel %vm530, %v547, %v469
        %v555 = vsel %vm531, %v547, %v470
        %v556 = vsel %vm532, %v547, %v471
        %v557 = vsel %vm533, %v547, %v472
        %v558 = vsel %vm534, %v547, %v473
        %v559 = vsel %vm535, %v547, %v474
        %v560 = vsel %vm536, %v547, %v475
        %v561 = vsel %vm537, %v547, %v476
        %v562 = vsel %vm538, %v547, %v477
        %v563 = vsel %vm539, %v547, %v478
        %v564 = vsel %vm540, %v547, %v479
        %v565 = vsel %vm541, %v547, %v480
        %v566 = vsel %vm542, %v547, %v481
        %v567 = vsel %vm543, %v547, %v482
        %vm568 = vcmp.eq.s32.totalorder %v307, 3
        %vm569 = vcmp.eq.s32.totalorder %v311, 3
        %vm570 = vcmp.eq.s32.totalorder %v315, 3
        %vm571 = vcmp.eq.s32.totalorder %v319, 3
        %vm572 = vcmp.eq.s32.totalorder %v323, 3
        %vm573 = vcmp.eq.s32.totalorder %v330, 3
        %vm574 = vcmp.eq.s32.totalorder %v334, 3
        %vm575 = vcmp.eq.s32.totalorder %v338, 3
        %vm576 = vcmp.eq.s32.totalorder %v342, 3
        %vm577 = vcmp.eq.s32.totalorder %v346, 3
        %vm578 = vcmp.eq.s32.totalorder %v353, 3
        %vm579 = vcmp.eq.s32.totalorder %v357, 3
        %vm580 = vcmp.eq.s32.totalorder %v361, 3
        %vm581 = vcmp.eq.s32.totalorder %v365, 3
        %vm582 = vcmp.eq.s32.totalorder %v369, 3
        %vm583 = vcmp.eq.s32.totalorder %v376, 3
        %vm584 = vcmp.eq.s32.totalorder %v380, 3
        %vm585 = vcmp.eq.s32.totalorder %v384, 3
        %vm586 = vcmp.eq.s32.totalorder %v388, 3
        %vm587 = vcmp.eq.s32.totalorder %v392, 3
        %v588 = vld [vmem:[#allocation4 + $0x3] sm:$0x1]
        %v589 = vsel %vm568, 1, 0
        %v590 = vsel %vm569, 1, 0
        %v591 = vsel %vm570, 1, 0
        %v592 = vsel %vm571, 1, 0
        %v593 = vsel %vm572, 1, 0
        %v594 = vsel %vm573, 1, 0
        %v595 = vsel %vm574, 1, 0
        %v596 = vsel %vm575, 1, 0
        %v597 = vsel %vm576, 1, 0
        %v598 = vsel %vm577, 1, 0
        %v599 = vsel %vm578, 1, 0
        %v600 = vsel %vm579, 1, 0
        %v601 = vsel %vm580, 1, 0
        %v602 = vsel %vm581, 1, 0
        %v603 = vsel %vm582, 1, 0
        %v604 = vsel %vm583, 1, 0
        %v605 = vsel %vm584, 1, 0
        %v606 = vsel %vm585, 1, 0
        %v607 = vsel %vm586, 1, 0
        %v608 = vsel %vm587, 1, 0
        %vm609 = vcmp.eq.s32.totalorder %v589, 1
        %vm610 = vcmp.eq.s32.totalorder %v590, 1
        %vm611 = vcmp.eq.s32.totalorder %v591, 1
        %vm612 = vcmp.eq.s32.totalorder %v592, 1
        %vm613 = vcmp.eq.s32.totalorder %v593, 1
        %vm614 = vcmp.eq.s32.totalorder %v594, 1
        %vm615 = vcmp.eq.s32.totalorder %v595, 1
        %vm616 = vcmp.eq.s32.totalorder %v596, 1
        %vm617 = vcmp.eq.s32.totalorder %v597, 1
        %vm618 = vcmp.eq.s32.totalorder %v598, 1
        %vm619 = vcmp.eq.s32.totalorder %v599, 1
        %vm620 = vcmp.eq.s32.totalorder %v600, 1
        %vm621 = vcmp.eq.s32.totalorder %v601, 1
        %vm622 = vcmp.eq.s32.totalorder %v602, 1
        %vm623 = vcmp.eq.s32.totalorder %v603, 1
        %vm624 = vcmp.eq.s32.totalorder %v604, 1
        %vm625 = vcmp.eq.s32.totalorder %v605, 1
        %vm626 = vcmp.eq.s32.totalorder %v606, 1
        %vm627 = vcmp.eq.s32.totalorder %v607, 1
        %vm628 = vcmp.eq.s32.totalorder %v608, 1
        %v629 = vlaneseq
        %v630 = vshrl.u32 %v629, 7
        %v631 = vsub.s32 0, %v630
        %v632 = vrot.slane %v588, %v631
        %v633 = vsel %vm609, %v632, %v548
        %v634 = vsel %vm610, %v632, %v549
        %v635 = vsel %vm611, %v632, %v550
        %v636 = vsel %vm612, %v632, %v551
        %v637 = vsel %vm613, %v632, %v552
        %v638 = vsel %vm614, %v632, %v553
        %v639 = vsel %vm615, %v632, %v554
        %v640 = vsel %vm616, %v632, %v555
        %v641 = vsel %vm617, %v632, %v556
        %v642 = vsel %vm618, %v632, %v557
        %v643 = vsel %vm619, %v632, %v558
        %v644 = vsel %vm620, %v632, %v559
        %v645 = vsel %vm621, %v632, %v560
        %v646 = vsel %vm622, %v632, %v561
        %v647 = vsel %vm623, %v632, %v562
        %v648 = vsel %vm624, %v632, %v563
        %v649 = vsel %vm625, %v632, %v564
        %v650 = vsel %vm626, %v632, %v565
        %v651 = vsel %vm627, %v632, %v566
        %v652 = vsel %vm628, %v632, %v567
        %vm653 = vcmp.eq.s32.totalorder %v307, 4
        %vm654 = vcmp.eq.s32.totalorder %v311, 4
        %vm655 = vcmp.eq.s32.totalorder %v315, 4
        %vm656 = vcmp.eq.s32.totalorder %v319, 4
        %vm657 = vcmp.eq.s32.totalorder %v323, 4
        %vm658 = vcmp.eq.s32.totalorder %v330, 4
        %vm659 = vcmp.eq.s32.totalorder %v334, 4
        %vm660 = vcmp.eq.s32.totalorder %v338, 4
        %vm661 = vcmp.eq.s32.totalorder %v342, 4
        %vm662 = vcmp.eq.s32.totalorder %v346, 4
        %vm663 = vcmp.eq.s32.totalorder %v353, 4
        %vm664 = vcmp.eq.s32.totalorder %v357, 4
        %vm665 = vcmp.eq.s32.totalorder %v361, 4
        %vm666 = vcmp.eq.s32.totalorder %v365, 4
        %vm667 = vcmp.eq.s32.totalorder %v369, 4
        %vm668 = vcmp.eq.s32.totalorder %v376, 4
        %vm669 = vcmp.eq.s32.totalorder %v380, 4
        %vm670 = vcmp.eq.s32.totalorder %v384, 4
        %vm671 = vcmp.eq.s32.totalorder %v388, 4
        %vm672 = vcmp.eq.s32.totalorder %v392, 4
        %v673 = vld [vmem:[#allocation4 + $0x4] sm:$0x1]
        %v674 = vsel %vm653, 1, 0
        %v675 = vsel %vm654, 1, 0
        %v676 = vsel %vm655, 1, 0
        %v677 = vsel %vm656, 1, 0
        %v678 = vsel %vm657, 1, 0
        %v679 = vsel %vm658, 1, 0
        %v680 = vsel %vm659, 1, 0
        %v681 = vsel %vm660, 1, 0
        %v682 = vsel %vm661, 1, 0
        %v683 = vsel %vm662, 1, 0
        %v684 = vsel %vm663, 1, 0
        %v685 = vsel %vm664, 1, 0
        %v686 = vsel %vm665, 1, 0
        %v687 = vsel %vm666, 1, 0
        %v688 = vsel %vm667, 1, 0
        %v689 = vsel %vm668, 1, 0
        %v690 = vsel %vm669, 1, 0
        %v691 = vsel %vm670, 1, 0
        %v692 = vsel %vm671, 1, 0
        %v693 = vsel %vm672, 1, 0
        %vm694 = vcmp.eq.s32.totalorder %v674, 1
        %vm695 = vcmp.eq.s32.totalorder %v675, 1
        %vm696 = vcmp.eq.s32.totalorder %v676, 1
        %vm697 = vcmp.eq.s32.totalorder %v677, 1
        %vm698 = vcmp.eq.s32.totalorder %v678, 1
        %vm699 = vcmp.eq.s32.totalorder %v679, 1
        %vm700 = vcmp.eq.s32.totalorder %v680, 1
        %vm701 = vcmp.eq.s32.totalorder %v681, 1
        %vm702 = vcmp.eq.s32.totalorder %v682, 1
        %vm703 = vcmp.eq.s32.totalorder %v683, 1
        %vm704 = vcmp.eq.s32.totalorder %v684, 1
        %vm705 = vcmp.eq.s32.totalorder %v685, 1
        %vm706 = vcmp.eq.s32.totalorder %v686, 1
        %vm707 = vcmp.eq.s32.totalorder %v687, 1
        %vm708 = vcmp.eq.s32.totalorder %v688, 1
        %vm709 = vcmp.eq.s32.totalorder %v689, 1
        %vm710 = vcmp.eq.s32.totalorder %v690, 1
        %vm711 = vcmp.eq.s32.totalorder %v691, 1
        %vm712 = vcmp.eq.s32.totalorder %v692, 1
        %vm713 = vcmp.eq.s32.totalorder %v693, 1
        %v714 = vlaneseq
        %v715 = vshrl.u32 %v714, 7
        %v716 = vsub.s32 0, %v715
        %v717 = vrot.slane %v673, %v716
        %v718 = vsel %vm694, %v717, %v633
        %v719 = vsel %vm695, %v717, %v634
        %v720 = vsel %vm696, %v717, %v635
        %v721 = vsel %vm697, %v717, %v636
        %v722 = vsel %vm698, %v717, %v637
        %v723 = vsel %vm699, %v717, %v638
        %v724 = vsel %vm700, %v717, %v639
        %v725 = vsel %vm701, %v717, %v640
        %v726 = vsel %vm702, %v717, %v641
        %v727 = vsel %vm703, %v717, %v642
        %v728 = vsel %vm704, %v717, %v643
        %v729 = vsel %vm705, %v717, %v644
        %v730 = vsel %vm706, %v717, %v645
        %v731 = vsel %vm707, %v717, %v646
        %v732 = vsel %vm708, %v717, %v647
        %v733 = vsel %vm709, %v717, %v648
        %v734 = vsel %vm710, %v717, %v649
        %v735 = vsel %vm711, %v717, %v650
        %v736 = vsel %vm712, %v717, %v651
        %v737 = vsel %vm713, %v717, %v652
        %vm738 = vcmp.eq.s32.totalorder %v307, 5
        %vm739 = vcmp.eq.s32.totalorder %v311, 5
        %vm740 = vcmp.eq.s32.totalorder %v315, 5
        %vm741 = vcmp.eq.s32.totalorder %v319, 5
        %vm742 = vcmp.eq.s32.totalorder %v323, 5
        %vm743 = vcmp.eq.s32.totalorder %v330, 5
        %vm744 = vcmp.eq.s32.totalorder %v334, 5
        %vm745 = vcmp.eq.s32.totalorder %v338, 5
        %vm746 = vcmp.eq.s32.totalorder %v342, 5
        %vm747 = vcmp.eq.s32.totalorder %v346, 5
        %vm748 = vcmp.eq.s32.totalorder %v353, 5
        %vm749 = vcmp.eq.s32.totalorder %v357, 5
        %vm750 = vcmp.eq.s32.totalorder %v361, 5
        %vm751 = vcmp.eq.s32.totalorder %v365, 5
        %vm752 = vcmp.eq.s32.totalorder %v369, 5
        %vm753 = vcmp.eq.s32.totalorder %v376, 5
        %vm754 = vcmp.eq.s32.totalorder %v380, 5
        %vm755 = vcmp.eq.s32.totalorder %v384, 5
        %vm756 = vcmp.eq.s32.totalorder %v388, 5
        %vm757 = vcmp.eq.s32.totalorder %v392, 5
        %v758 = vld [vmem:[#allocation4 + $0x5] sm:$0x1]
        %v759 = vsel %vm738, 1, 0
        %v760 = vsel %vm739, 1, 0
        %v761 = vsel %vm740, 1, 0
        %v762 = vsel %vm741, 1, 0
        %v763 = vsel %vm742, 1, 0
        %v764 = vsel %vm743, 1, 0
        %v765 = vsel %vm744, 1, 0
        %v766 = vsel %vm745, 1, 0
        %v767 = vsel %vm746, 1, 0
        %v768 = vsel %vm747, 1, 0
        %v769 = vsel %vm748, 1, 0
        %v770 = vsel %vm749, 1, 0
        %v771 = vsel %vm750, 1, 0
        %v772 = vsel %vm751, 1, 0
        %v773 = vsel %vm752, 1, 0
        %v774 = vsel %vm753, 1, 0
        %v775 = vsel %vm754, 1, 0
        %v776 = vsel %vm755, 1, 0
        %v777 = vsel %vm756, 1, 0
        %v778 = vsel %vm757, 1, 0
        %vm779 = vcmp.eq.s32.totalorder %v759, 1
        %vm780 = vcmp.eq.s32.totalorder %v760, 1
        %vm781 = vcmp.eq.s32.totalorder %v761, 1
        %vm782 = vcmp.eq.s32.totalorder %v762, 1
        %vm783 = vcmp.eq.s32.totalorder %v763, 1
        %vm784 = vcmp.eq.s32.totalorder %v764, 1
        %vm785 = vcmp.eq.s32.totalorder %v765, 1
        %vm786 = vcmp.eq.s32.totalorder %v766, 1
        %vm787 = vcmp.eq.s32.totalorder %v767, 1
        %vm788 = vcmp.eq.s32.totalorder %v768, 1
        %vm789 = vcmp.eq.s32.totalorder %v769, 1
        %vm790 = vcmp.eq.s32.totalorder %v770, 1
        %vm791 = vcmp.eq.s32.totalorder %v771, 1
        %vm792 = vcmp.eq.s32.totalorder %v772, 1
        %vm793 = vcmp.eq.s32.totalorder %v773, 1
        %vm794 = vcmp.eq.s32.totalorder %v774, 1
        %vm795 = vcmp.eq.s32.totalorder %v775, 1
        %vm796 = vcmp.eq.s32.totalorder %v776, 1
        %vm797 = vcmp.eq.s32.totalorder %v777, 1
        %vm798 = vcmp.eq.s32.totalorder %v778, 1
        %v799 = vlaneseq
        %v800 = vshrl.u32 %v799, 7
        %v801 = vsub.s32 0, %v800
        %v802 = vrot.slane %v758, %v801
        %v803 = vsel %vm779, %v802, %v718
        %v804 = vsel %vm780, %v802, %v719
        %v805 = vsel %vm781, %v802, %v720
        %v806 = vsel %vm782, %v802, %v721
        %v807 = vsel %vm783, %v802, %v722
        %v808 = vsel %vm784, %v802, %v723
        %v809 = vsel %vm785, %v802, %v724
        %v810 = vsel %vm786, %v802, %v725
        %v811 = vsel %vm787, %v802, %v726
        %v812 = vsel %vm788, %v802, %v727
        %v813 = vsel %vm789, %v802, %v728
        %v814 = vsel %vm790, %v802, %v729
        %v815 = vsel %vm791, %v802, %v730
        %v816 = vsel %vm792, %v802, %v731
        %v817 = vsel %vm793, %v802, %v732
        %v818 = vsel %vm794, %v802, %v733
        %v819 = vsel %vm795, %v802, %v734
        %v820 = vsel %vm796, %v802, %v735
        %v821 = vsel %vm797, %v802, %v736
        %v822 = vsel %vm798, %v802, %v737
        %vm823 = vcmp.eq.s32.totalorder %v307, 6
        %vm824 = vcmp.eq.s32.totalorder %v311, 6
        %vm825 = vcmp.eq.s32.totalorder %v315, 6
        %vm826 = vcmp.eq.s32.totalorder %v319, 6
        %vm827 = vcmp.eq.s32.totalorder %v323, 6
        %vm828 = vcmp.eq.s32.totalorder %v330, 6
        %vm829 = vcmp.eq.s32.totalorder %v334, 6
        %vm830 = vcmp.eq.s32.totalorder %v338, 6
        %vm831 = vcmp.eq.s32.totalorder %v342, 6
        %vm832 = vcmp.eq.s32.totalorder %v346, 6
        %vm833 = vcmp.eq.s32.totalorder %v353, 6
        %vm834 = vcmp.eq.s32.totalorder %v357, 6
        %vm835 = vcmp.eq.s32.totalorder %v361, 6
        %vm836 = vcmp.eq.s32.totalorder %v365, 6
        %vm837 = vcmp.eq.s32.totalorder %v369, 6
        %vm838 = vcmp.eq.s32.totalorder %v376, 6
        %vm839 = vcmp.eq.s32.totalorder %v380, 6
        %vm840 = vcmp.eq.s32.totalorder %v384, 6
        %vm841 = vcmp.eq.s32.totalorder %v388, 6
        %vm842 = vcmp.eq.s32.totalorder %v392, 6
        %v843 = vld [vmem:[#allocation4 + $0x6] sm:$0x1]
        %v844 = vsel %vm823, 1, 0
        %v845 = vsel %vm824, 1, 0
        %v846 = vsel %vm825, 1, 0
        %v847 = vsel %vm826, 1, 0
        %v848 = vsel %vm827, 1, 0
        %v849 = vsel %vm828, 1, 0
        %v850 = vsel %vm829, 1, 0
        %v851 = vsel %vm830, 1, 0
        %v852 = vsel %vm831, 1, 0
        %v853 = vsel %vm832, 1, 0
        %v854 = vsel %vm833, 1, 0
        %v855 = vsel %vm834, 1, 0
        %v856 = vsel %vm835, 1, 0
        %v857 = vsel %vm836, 1, 0
        %v858 = vsel %vm837, 1, 0
        %v859 = vsel %vm838, 1, 0
        %v860 = vsel %vm839, 1, 0
        %v861 = vsel %vm840, 1, 0
        %v862 = vsel %vm841, 1, 0
        %v863 = vsel %vm842, 1, 0
        %vm864 = vcmp.eq.s32.totalorder %v844, 1
        %vm865 = vcmp.eq.s32.totalorder %v845, 1
        %vm866 = vcmp.eq.s32.totalorder %v846, 1
        %vm867 = vcmp.eq.s32.totalorder %v847, 1
        %vm868 = vcmp.eq.s32.totalorder %v848, 1
        %vm869 = vcmp.eq.s32.totalorder %v849, 1
        %vm870 = vcmp.eq.s32.totalorder %v850, 1
        %vm871 = vcmp.eq.s32.totalorder %v851, 1
        %vm872 = vcmp.eq.s32.totalorder %v852, 1
        %vm873 = vcmp.eq.s32.totalorder %v853, 1
        %vm874 = vcmp.eq.s32.totalorder %v854, 1
        %vm875 = vcmp.eq.s32.totalorder %v855, 1
        %vm876 = vcmp.eq.s32.totalorder %v856, 1
        %vm877 = vcmp.eq.s32.totalorder %v857, 1
        %vm878 = vcmp.eq.s32.totalorder %v858, 1
        %vm879 = vcmp.eq.s32.totalorder %v859, 1
        %vm880 = vcmp.eq.s32.totalorder %v860, 1
        %vm881 = vcmp.eq.s32.totalorder %v861, 1
        %vm882 = vcmp.eq.s32.totalorder %v862, 1
        %vm883 = vcmp.eq.s32.totalorder %v863, 1
        %v884 = vlaneseq
        %v885 = vshrl.u32 %v884, 7
        %v886 = vsub.s32 0, %v885
        %v887 = vrot.slane %v843, %v886
        %v888 = vsel %vm864, %v887, %v803
        %v889 = vsel %vm865, %v887, %v804
        %v890 = vsel %vm866, %v887, %v805
        %v891 = vsel %vm867, %v887, %v806
        %v892 = vsel %vm868, %v887, %v807
        %v893 = vsel %vm869, %v887, %v808
        %v894 = vsel %vm870, %v887, %v809
        %v895 = vsel %vm871, %v887, %v810
        %v896 = vsel %vm872, %v887, %v811
        %v897 = vsel %vm873, %v887, %v812
        %v898 = vsel %vm874, %v887, %v813
        %v899 = vsel %vm875, %v887, %v814
        %v900 = vsel %vm876, %v887, %v815
        %v901 = vsel %vm877, %v887, %v816
        %v902 = vsel %vm878, %v887, %v817
        %v903 = vsel %vm879, %v887, %v818
        %v904 = vsel %vm880, %v887, %v819
        %v905 = vsel %vm881, %v887, %v820
        %v906 = vsel %vm882, %v887, %v821
        %v907 = vsel %vm883, %v887, %v822
        %vm908 = vcmp.eq.s32.totalorder %v307, 7
        %vm909 = vcmp.eq.s32.totalorder %v311, 7
        %vm910 = vcmp.eq.s32.totalorder %v315, 7
        %vm911 = vcmp.eq.s32.totalorder %v319, 7
        %vm912 = vcmp.eq.s32.totalorder %v323, 7
        %vm913 = vcmp.eq.s32.totalorder %v330, 7
        %vm914 = vcmp.eq.s32.totalorder %v334, 7
        %vm915 = vcmp.eq.s32.totalorder %v338, 7
        %vm916 = vcmp.eq.s32.totalorder %v342, 7
        %vm917 = vcmp.eq.s32.totalorder %v346, 7
        %vm918 = vcmp.eq.s32.totalorder %v353, 7
        %vm919 = vcmp.eq.s32.totalorder %v357, 7
        %vm920 = vcmp.eq.s32.totalorder %v361, 7
        %vm921 = vcmp.eq.s32.totalorder %v365, 7
        %vm922 = vcmp.eq.s32.totalorder %v369, 7
        %vm923 = vcmp.eq.s32.totalorder %v376, 7
        %vm924 = vcmp.eq.s32.totalorder %v380, 7
        %vm925 = vcmp.eq.s32.totalorder %v384, 7
        %vm926 = vcmp.eq.s32.totalorder %v388, 7
        %vm927 = vcmp.eq.s32.totalorder %v392, 7
        %v928 = vld [vmem:[#allocation4 + $0x7] sm:$0x1]
        %v929 = vsel %vm908, 1, 0
        %v930 = vsel %vm909, 1, 0
        %v931 = vsel %vm910, 1, 0
        %v932 = vsel %vm911, 1, 0
        %v933 = vsel %vm912, 1, 0
        %v934 = vsel %vm913, 1, 0
        %v935 = vsel %vm914, 1, 0
        %v936 = vsel %vm915, 1, 0
        %v937 = vsel %vm916, 1, 0
        %v938 = vsel %vm917, 1, 0
        %v939 = vsel %vm918, 1, 0
        %v940 = vsel %vm919, 1, 0
        %v941 = vsel %vm920, 1, 0
        %v942 = vsel %vm921, 1, 0
        %v943 = vsel %vm922, 1, 0
        %v944 = vsel %vm923, 1, 0
        %v945 = vsel %vm924, 1, 0
        %v946 = vsel %vm925, 1, 0
        %v947 = vsel %vm926, 1, 0
        %v948 = vsel %vm927, 1, 0
        %vm949 = vcmp.eq.s32.totalorder %v929, 1
        %vm950 = vcmp.eq.s32.totalorder %v930, 1
        %vm951 = vcmp.eq.s32.totalorder %v931, 1
        %vm952 = vcmp.eq.s32.totalorder %v932, 1
        %vm953 = vcmp.eq.s32.totalorder %v933, 1
        %vm954 = vcmp.eq.s32.totalorder %v934, 1
        %vm955 = vcmp.eq.s32.totalorder %v935, 1
        %vm956 = vcmp.eq.s32.totalorder %v936, 1
        %vm957 = vcmp.eq.s32.totalorder %v937, 1
        %vm958 = vcmp.eq.s32.totalorder %v938, 1
        %vm959 = vcmp.eq.s32.totalorder %v939, 1
        %vm960 = vcmp.eq.s32.totalorder %v940, 1
        %vm961 = vcmp.eq.s32.totalorder %v941, 1
        %vm962 = vcmp.eq.s32.totalorder %v942, 1
        %vm963 = vcmp.eq.s32.totalorder %v943, 1
        %vm964 = vcmp.eq.s32.totalorder %v944, 1
        %vm965 = vcmp.eq.s32.totalorder %v945, 1
        %vm966 = vcmp.eq.s32.totalorder %v946, 1
        %vm967 = vcmp.eq.s32.totalorder %v947, 1
        %vm968 = vcmp.eq.s32.totalorder %v948, 1
        %v969 = vlaneseq
        %v970 = vshrl.u32 %v969, 7
        %v971 = vsub.s32 0, %v970
        %v972 = vrot.slane %v928, %v971
        %v973 = vsel %vm949, %v972, %v888
        %v974 = vsel %vm950, %v972, %v889
        %v975 = vsel %vm951, %v972, %v890
        %v976 = vsel %vm952, %v972, %v891
        %v977 = vsel %vm953, %v972, %v892
        %v978 = vsel %vm954, %v972, %v893
        %v979 = vsel %vm955, %v972, %v894
        %v980 = vsel %vm956, %v972, %v895
        %v981 = vsel %vm957, %v972, %v896
        %v982 = vsel %vm958, %v972, %v897
        %v983 = vsel %vm959, %v972, %v898
        %v984 = vsel %vm960, %v972, %v899
        %v985 = vsel %vm961, %v972, %v900
        %v986 = vsel %vm962, %v972, %v901
        %v987 = vsel %vm963, %v972, %v902
        %v988 = vsel %vm964, %v972, %v903
        %v989 = vsel %vm965, %v972, %v904
        %v990 = vsel %vm966, %v972, %v905
        %v991 = vsel %vm967, %v972, %v906
        %v992 = vsel %vm968, %v972, %v907
        %vm993 = vcmp.eq.s32.totalorder %v307, 8
        %vm994 = vcmp.eq.s32.totalorder %v311, 8
        %vm995 = vcmp.eq.s32.totalorder %v315, 8
        %vm996 = vcmp.eq.s32.totalorder %v319, 8
        %vm997 = vcmp.eq.s32.totalorder %v323, 8
        %vm998 = vcmp.eq.s32.totalorder %v330, 8
        %vm999 = vcmp.eq.s32.totalorder %v334, 8
        %vm1000 = vcmp.eq.s32.totalorder %v338, 8
        %vm1001 = vcmp.eq.s32.totalorder %v342, 8
        %vm1002 = vcmp.eq.s32.totalorder %v346, 8
        %vm1003 = vcmp.eq.s32.totalorder %v353, 8
        %vm1004 = vcmp.eq.s32.totalorder %v357, 8
        %vm1005 = vcmp.eq.s32.totalorder %v361, 8
        %vm1006 = vcmp.eq.s32.totalorder %v365, 8
        %vm1007 = vcmp.eq.s32.totalorder %v369, 8
        %vm1008 = vcmp.eq.s32.totalorder %v376, 8
        %vm1009 = vcmp.eq.s32.totalorder %v380, 8
        %vm1010 = vcmp.eq.s32.totalorder %v384, 8
        %vm1011 = vcmp.eq.s32.totalorder %v388, 8
        %vm1012 = vcmp.eq.s32.totalorder %v392, 8
        %v1013 = vld [vmem:[#allocation4 + $0x8] sm:$0x1]
        %v1014 = vsel %vm993, 1, 0
        %v1015 = vsel %vm994, 1, 0
        %v1016 = vsel %vm995, 1, 0
        %v1017 = vsel %vm996, 1, 0
        %v1018 = vsel %vm997, 1, 0
        %v1019 = vsel %vm998, 1, 0
        %v1020 = vsel %vm999, 1, 0
        %v1021 = vsel %vm1000, 1, 0
        %v1022 = vsel %vm1001, 1, 0
        %v1023 = vsel %vm1002, 1, 0
        %v1024 = vsel %vm1003, 1, 0
        %v1025 = vsel %vm1004, 1, 0
        %v1026 = vsel %vm1005, 1, 0
        %v1027 = vsel %vm1006, 1, 0
        %v1028 = vsel %vm1007, 1, 0
        %v1029 = vsel %vm1008, 1, 0
        %v1030 = vsel %vm1009, 1, 0
        %v1031 = vsel %vm1010, 1, 0
        %v1032 = vsel %vm1011, 1, 0
        %v1033 = vsel %vm1012, 1, 0
        %vm1034 = vcmp.eq.s32.totalorder %v1014, 1
        %vm1035 = vcmp.eq.s32.totalorder %v1015, 1
        %vm1036 = vcmp.eq.s32.totalorder %v1016, 1
        %vm1037 = vcmp.eq.s32.totalorder %v1017, 1
        %vm1038 = vcmp.eq.s32.totalorder %v1018, 1
        %vm1039 = vcmp.eq.s32.totalorder %v1019, 1
        %vm1040 = vcmp.eq.s32.totalorder %v1020, 1
        %vm1041 = vcmp.eq.s32.totalorder %v1021, 1
        %vm1042 = vcmp.eq.s32.totalorder %v1022, 1
        %vm1043 = vcmp.eq.s32.totalorder %v1023, 1
        %vm1044 = vcmp.eq.s32.totalorder %v1024, 1
        %vm1045 = vcmp.eq.s32.totalorder %v1025, 1
        %vm1046 = vcmp.eq.s32.totalorder %v1026, 1
        %vm1047 = vcmp.eq.s32.totalorder %v1027, 1
        %vm1048 = vcmp.eq.s32.totalorder %v1028, 1
        %vm1049 = vcmp.eq.s32.totalorder %v1029, 1
        %vm1050 = vcmp.eq.s32.totalorder %v1030, 1
        %vm1051 = vcmp.eq.s32.totalorder %v1031, 1
        %vm1052 = vcmp.eq.s32.totalorder %v1032, 1
        %vm1053 = vcmp.eq.s32.totalorder %v1033, 1
        %v1054 = vlaneseq
        %v1055 = vshrl.u32 %v1054, 7
        %v1056 = vsub.s32 0, %v1055
        %v1057 = vrot.slane %v1013, %v1056
        %v1058 = vsel %vm1034, %v1057, %v973
        %v1059 = vsel %vm1035, %v1057, %v974
        %v1060 = vsel %vm1036, %v1057, %v975
        %v1061 = vsel %vm1037, %v1057, %v976
        %v1062 = vsel %vm1038, %v1057, %v977
        %v1063 = vsel %vm1039, %v1057, %v978
        %v1064 = vsel %vm1040, %v1057, %v979
        %v1065 = vsel %vm1041, %v1057, %v980
        %v1066 = vsel %vm1042, %v1057, %v981
        %v1067 = vsel %vm1043, %v1057, %v982
        %v1068 = vsel %vm1044, %v1057, %v983
        %v1069 = vsel %vm1045, %v1057, %v984
        %v1070 = vsel %vm1046, %v1057, %v985
        %v1071 = vsel %vm1047, %v1057, %v986
        %v1072 = vsel %vm1048, %v1057, %v987
        %v1073 = vsel %vm1049, %v1057, %v988
        %v1074 = vsel %vm1050, %v1057, %v989
        %v1075 = vsel %vm1051, %v1057, %v990
        %v1076 = vsel %vm1052, %v1057, %v991
        %v1077 = vsel %vm1053, %v1057, %v992
        %vm1078 = vcmp.eq.s32.totalorder %v307, 9
        %vm1079 = vcmp.eq.s32.totalorder %v311, 9
        %vm1080 = vcmp.eq.s32.totalorder %v315, 9
        %vm1081 = vcmp.eq.s32.totalorder %v319, 9
        %vm1082 = vcmp.eq.s32.totalorder %v323, 9
        %vm1083 = vcmp.eq.s32.totalorder %v330, 9
        %vm1084 = vcmp.eq.s32.totalorder %v334, 9
        %vm1085 = vcmp.eq.s32.totalorder %v338, 9
        %vm1086 = vcmp.eq.s32.totalorder %v342, 9
        %vm1087 = vcmp.eq.s32.totalorder %v346, 9
        %vm1088 = vcmp.eq.s32.totalorder %v353, 9
        %vm1089 = vcmp.eq.s32.totalorder %v357, 9
        %vm1090 = vcmp.eq.s32.totalorder %v361, 9
        %vm1091 = vcmp.eq.s32.totalorder %v365, 9
        %vm1092 = vcmp.eq.s32.totalorder %v369, 9
        %vm1093 = vcmp.eq.s32.totalorder %v376, 9
        %vm1094 = vcmp.eq.s32.totalorder %v380, 9
        %vm1095 = vcmp.eq.s32.totalorder %v384, 9
        %vm1096 = vcmp.eq.s32.totalorder %v388, 9
        %vm1097 = vcmp.eq.s32.totalorder %v392, 9
        %v1098 = vld [vmem:[#allocation4 + $0x9] sm:$0x1]
        %v1099 = vsel %vm1078, 1, 0
        %v1100 = vsel %vm1079, 1, 0
        %v1101 = vsel %vm1080, 1, 0
        %v1102 = vsel %vm1081, 1, 0
        %v1103 = vsel %vm1082, 1, 0
        %v1104 = vsel %vm1083, 1, 0
        %v1105 = vsel %vm1084, 1, 0
        %v1106 = vsel %vm1085, 1, 0
        %v1107 = vsel %vm1086, 1, 0
        %v1108 = vsel %vm1087, 1, 0
        %v1109 = vsel %vm1088, 1, 0
        %v1110 = vsel %vm1089, 1, 0
        %v1111 = vsel %vm1090, 1, 0
        %v1112 = vsel %vm1091, 1, 0
        %v1113 = vsel %vm1092, 1, 0
        %v1114 = vsel %vm1093, 1, 0
        %v1115 = vsel %vm1094, 1, 0
        %v1116 = vsel %vm1095, 1, 0
        %v1117 = vsel %vm1096, 1, 0
        %v1118 = vsel %vm1097, 1, 0
        %vm1119 = vcmp.eq.s32.totalorder %v1099, 1
        %vm1120 = vcmp.eq.s32.totalorder %v1100, 1
        %vm1121 = vcmp.eq.s32.totalorder %v1101, 1
        %vm1122 = vcmp.eq.s32.totalorder %v1102, 1
        %vm1123 = vcmp.eq.s32.totalorder %v1103, 1
        %vm1124 = vcmp.eq.s32.totalorder %v1104, 1
        %vm1125 = vcmp.eq.s32.totalorder %v1105, 1
        %vm1126 = vcmp.eq.s32.totalorder %v1106, 1
        %vm1127 = vcmp.eq.s32.totalorder %v1107, 1
        %vm1128 = vcmp.eq.s32.totalorder %v1108, 1
        %vm1129 = vcmp.eq.s32.totalorder %v1109, 1
        %vm1130 = vcmp.eq.s32.totalorder %v1110, 1
        %vm1131 = vcmp.eq.s32.totalorder %v1111, 1
        %vm1132 = vcmp.eq.s32.totalorder %v1112, 1
        %vm1133 = vcmp.eq.s32.totalorder %v1113, 1
        %vm1134 = vcmp.eq.s32.totalorder %v1114, 1
        %vm1135 = vcmp.eq.s32.totalorder %v1115, 1
        %vm1136 = vcmp.eq.s32.totalorder %v1116, 1
        %vm1137 = vcmp.eq.s32.totalorder %v1117, 1
        %vm1138 = vcmp.eq.s32.totalorder %v1118, 1
        %v1139 = vlaneseq
        %v1140 = vshrl.u32 %v1139, 7
        %v1141 = vsub.s32 0, %v1140
        %v1142 = vrot.slane %v1098, %v1141
        %v1143 = vsel %vm1119, %v1142, %v1058
        %v1144 = vsel %vm1120, %v1142, %v1059
        %v1145 = vsel %vm1121, %v1142, %v1060
        %v1146 = vsel %vm1122, %v1142, %v1061
        %v1147 = vsel %vm1123, %v1142, %v1062
        %v1148 = vsel %vm1124, %v1142, %v1063
        %v1149 = vsel %vm1125, %v1142, %v1064
        %v1150 = vsel %vm1126, %v1142, %v1065
        %v1151 = vsel %vm1127, %v1142, %v1066
        %v1152 = vsel %vm1128, %v1142, %v1067
        %v1153 = vsel %vm1129, %v1142, %v1068
        %v1154 = vsel %vm1130, %v1142, %v1069
        %v1155 = vsel %vm1131, %v1142, %v1070
        %v1156 = vsel %vm1132, %v1142, %v1071
        %v1157 = vsel %vm1133, %v1142, %v1072
        %v1158 = vsel %vm1134, %v1142, %v1073
        %v1159 = vsel %vm1135, %v1142, %v1074
        %v1160 = vsel %vm1136, %v1142, %v1075
        %v1161 = vsel %vm1137, %v1142, %v1076
        %v1162 = vsel %vm1138, %v1142, %v1077
        %vm1163 = vcmp.eq.s32.totalorder %v307, 10
        %vm1164 = vcmp.eq.s32.totalorder %v311, 10
        %vm1165 = vcmp.eq.s32.totalorder %v315, 10
        %vm1166 = vcmp.eq.s32.totalorder %v319, 10
        %vm1167 = vcmp.eq.s32.totalorder %v323, 10
        %vm1168 = vcmp.eq.s32.totalorder %v330, 10
        %vm1169 = vcmp.eq.s32.totalorder %v334, 10
        %vm1170 = vcmp.eq.s32.totalorder %v338, 10
        %vm1171 = vcmp.eq.s32.totalorder %v342, 10
        %vm1172 = vcmp.eq.s32.totalorder %v346, 10
        %vm1173 = vcmp.eq.s32.totalorder %v353, 10
        %vm1174 = vcmp.eq.s32.totalorder %v357, 10
        %vm1175 = vcmp.eq.s32.totalorder %v361, 10
        %vm1176 = vcmp.eq.s32.totalorder %v365, 10
        %vm1177 = vcmp.eq.s32.totalorder %v369, 10
        %vm1178 = vcmp.eq.s32.totalorder %v376, 10
        %vm1179 = vcmp.eq.s32.totalorder %v380, 10
        %vm1180 = vcmp.eq.s32.totalorder %v384, 10
        %vm1181 = vcmp.eq.s32.totalorder %v388, 10
        %vm1182 = vcmp.eq.s32.totalorder %v392, 10
        %v1183 = vld [vmem:[#allocation4 + $0xa] sm:$0x1]
        %v1184 = vsel %vm1163, 1, 0
        %v1185 = vsel %vm1164, 1, 0
        %v1186 = vsel %vm1165, 1, 0
        %v1187 = vsel %vm1166, 1, 0
        %v1188 = vsel %vm1167, 1, 0
        %v1189 = vsel %vm1168, 1, 0
        %v1190 = vsel %vm1169, 1, 0
        %v1191 = vsel %vm1170, 1, 0
        %v1192 = vsel %vm1171, 1, 0
        %v1193 = vsel %vm1172, 1, 0
        %v1194 = vsel %vm1173, 1, 0
        %v1195 = vsel %vm1174, 1, 0
        %v1196 = vsel %vm1175, 1, 0
        %v1197 = vsel %vm1176, 1, 0
        %v1198 = vsel %vm1177, 1, 0
        %v1199 = vsel %vm1178, 1, 0
        %v1200 = vsel %vm1179, 1, 0
        %v1201 = vsel %vm1180, 1, 0
        %v1202 = vsel %vm1181, 1, 0
        %v1203 = vsel %vm1182, 1, 0
        %vm1204 = vcmp.eq.s32.totalorder %v1184, 1
        %vm1205 = vcmp.eq.s32.totalorder %v1185, 1
        %vm1206 = vcmp.eq.s32.totalorder %v1186, 1
        %vm1207 = vcmp.eq.s32.totalorder %v1187, 1
        %vm1208 = vcmp.eq.s32.totalorder %v1188, 1
        %vm1209 = vcmp.eq.s32.totalorder %v1189, 1
        %vm1210 = vcmp.eq.s32.totalorder %v1190, 1
        %vm1211 = vcmp.eq.s32.totalorder %v1191, 1
        %vm1212 = vcmp.eq.s32.totalorder %v1192, 1
        %vm1213 = vcmp.eq.s32.totalorder %v1193, 1
        %vm1214 = vcmp.eq.s32.totalorder %v1194, 1
        %vm1215 = vcmp.eq.s32.totalorder %v1195, 1
        %vm1216 = vcmp.eq.s32.totalorder %v1196, 1
        %vm1217 = vcmp.eq.s32.totalorder %v1197, 1
        %vm1218 = vcmp.eq.s32.totalorder %v1198, 1
        %vm1219 = vcmp.eq.s32.totalorder %v1199, 1
        %vm1220 = vcmp.eq.s32.totalorder %v1200, 1
        %vm1221 = vcmp.eq.s32.totalorder %v1201, 1
        %vm1222 = vcmp.eq.s32.totalorder %v1202, 1
        %vm1223 = vcmp.eq.s32.totalorder %v1203, 1
        %v1224 = vlaneseq
        %v1225 = vshrl.u32 %v1224, 7
        %v1226 = vsub.s32 0, %v1225
        %v1227 = vrot.slane %v1183, %v1226
        %v1228 = vsel %vm1204, %v1227, %v1143
        %v1229 = vsel %vm1205, %v1227, %v1144
        %v1230 = vsel %vm1206, %v1227, %v1145
        %v1231 = vsel %vm1207, %v1227, %v1146
        %v1232 = vsel %vm1208, %v1227, %v1147
        %v1233 = vsel %vm1209, %v1227, %v1148
        %v1234 = vsel %vm1210, %v1227, %v1149
        %v1235 = vsel %vm1211, %v1227, %v1150
        %v1236 = vsel %vm1212, %v1227, %v1151
        %v1237 = vsel %vm1213, %v1227, %v1152
        %v1238 = vsel %vm1214, %v1227, %v1153
        %v1239 = vsel %vm1215, %v1227, %v1154
        %v1240 = vsel %vm1216, %v1227, %v1155
        %v1241 = vsel %vm1217, %v1227, %v1156
        %v1242 = vsel %vm1218, %v1227, %v1157
        %v1243 = vsel %vm1219, %v1227, %v1158
        %v1244 = vsel %vm1220, %v1227, %v1159
        %v1245 = vsel %vm1221, %v1227, %v1160
        %v1246 = vsel %vm1222, %v1227, %v1161
        %v1247 = vsel %vm1223, %v1227, %v1162
        %vm1248 = vcmp.eq.s32.totalorder %v307, 11
        %vm1249 = vcmp.eq.s32.totalorder %v311, 11
        %vm1250 = vcmp.eq.s32.totalorder %v315, 11
        %vm1251 = vcmp.eq.s32.totalorder %v319, 11
        %vm1252 = vcmp.eq.s32.totalorder %v323, 11
        %vm1253 = vcmp.eq.s32.totalorder %v330, 11
        %vm1254 = vcmp.eq.s32.totalorder %v334, 11
        %vm1255 = vcmp.eq.s32.totalorder %v338, 11
        %vm1256 = vcmp.eq.s32.totalorder %v342, 11
        %vm1257 = vcmp.eq.s32.totalorder %v346, 11
        %vm1258 = vcmp.eq.s32.totalorder %v353, 11
        %vm1259 = vcmp.eq.s32.totalorder %v357, 11
        %vm1260 = vcmp.eq.s32.totalorder %v361, 11
        %vm1261 = vcmp.eq.s32.totalorder %v365, 11
        %vm1262 = vcmp.eq.s32.totalorder %v369, 11
        %vm1263 = vcmp.eq.s32.totalorder %v376, 11
        %vm1264 = vcmp.eq.s32.totalorder %v380, 11
        %vm1265 = vcmp.eq.s32.totalorder %v384, 11
        %vm1266 = vcmp.eq.s32.totalorder %v388, 11
        %vm1267 = vcmp.eq.s32.totalorder %v392, 11
        %v1268 = vld [vmem:[#allocation4 + $0xb] sm:$0x1]
        %v1269 = vsel %vm1248, 1, 0
        %v1270 = vsel %vm1249, 1, 0
        %v1271 = vsel %vm1250, 1, 0
        %v1272 = vsel %vm1251, 1, 0
        %v1273 = vsel %vm1252, 1, 0
        %v1274 = vsel %vm1253, 1, 0
        %v1275 = vsel %vm1254, 1, 0
        %v1276 = vsel %vm1255, 1, 0
        %v1277 = vsel %vm1256, 1, 0
        %v1278 = vsel %vm1257, 1, 0
        %v1279 = vsel %vm1258, 1, 0
        %v1280 = vsel %vm1259, 1, 0
        %v1281 = vsel %vm1260, 1, 0
        %v1282 = vsel %vm1261, 1, 0
        %v1283 = vsel %vm1262, 1, 0
        %v1284 = vsel %vm1263, 1, 0
        %v1285 = vsel %vm1264, 1, 0
        %v1286 = vsel %vm1265, 1, 0
        %v1287 = vsel %vm1266, 1, 0
        %v1288 = vsel %vm1267, 1, 0
        %vm1289 = vcmp.eq.s32.totalorder %v1269, 1
        %vm1290 = vcmp.eq.s32.totalorder %v1270, 1
        %vm1291 = vcmp.eq.s32.totalorder %v1271, 1
        %vm1292 = vcmp.eq.s32.totalorder %v1272, 1
        %vm1293 = vcmp.eq.s32.totalorder %v1273, 1
        %vm1294 = vcmp.eq.s32.totalorder %v1274, 1
        %vm1295 = vcmp.eq.s32.totalorder %v1275, 1
        %vm1296 = vcmp.eq.s32.totalorder %v1276, 1
        %vm1297 = vcmp.eq.s32.totalorder %v1277, 1
        %vm1298 = vcmp.eq.s32.totalorder %v1278, 1
        %vm1299 = vcmp.eq.s32.totalorder %v1279, 1
        %vm1300 = vcmp.eq.s32.totalorder %v1280, 1
        %vm1301 = vcmp.eq.s32.totalorder %v1281, 1
        %vm1302 = vcmp.eq.s32.totalorder %v1282, 1
        %vm1303 = vcmp.eq.s32.totalorder %v1283, 1
        %vm1304 = vcmp.eq.s32.totalorder %v1284, 1
        %vm1305 = vcmp.eq.s32.totalorder %v1285, 1
        %vm1306 = vcmp.eq.s32.totalorder %v1286, 1
        %vm1307 = vcmp.eq.s32.totalorder %v1287, 1
        %vm1308 = vcmp.eq.s32.totalorder %v1288, 1
        %v1309 = vlaneseq
        %v1310 = vshrl.u32 %v1309, 7
        %v1311 = vsub.s32 0, %v1310
        %v1312 = vrot.slane %v1268, %v1311
        %v1313 = vsel %vm1289, %v1312, %v1228
        %v1314 = vsel %vm1290, %v1312, %v1229
        %v1315 = vsel %vm1291, %v1312, %v1230
        %v1316 = vsel %vm1292, %v1312, %v1231
        %v1317 = vsel %vm1293, %v1312, %v1232
        %v1318 = vsel %vm1294, %v1312, %v1233
        %v1319 = vsel %vm1295, %v1312, %v1234
        %v1320 = vsel %vm1296, %v1312, %v1235
        %v1321 = vsel %vm1297, %v1312, %v1236
        %v1322 = vsel %vm1298, %v1312, %v1237
        %v1323 = vsel %vm1299, %v1312, %v1238
        %v1324 = vsel %vm1300, %v1312, %v1239
        %v1325 = vsel %vm1301, %v1312, %v1240
        %v1326 = vsel %vm1302, %v1312, %v1241
        %v1327 = vsel %vm1303, %v1312, %v1242
        %v1328 = vsel %vm1304, %v1312, %v1243
        %v1329 = vsel %vm1305, %v1312, %v1244
        %v1330 = vsel %vm1306, %v1312, %v1245
        %v1331 = vsel %vm1307, %v1312, %v1246
        %v1332 = vsel %vm1308, %v1312, %v1247
        %vm1333 = vcmp.eq.s32.totalorder %v307, 12
        %vm1334 = vcmp.eq.s32.totalorder %v311, 12
        %vm1335 = vcmp.eq.s32.totalorder %v315, 12
        %vm1336 = vcmp.eq.s32.totalorder %v319, 12
        %vm1337 = vcmp.eq.s32.totalorder %v323, 12
        %vm1338 = vcmp.eq.s32.totalorder %v330, 12
        %vm1339 = vcmp.eq.s32.totalorder %v334, 12
        %vm1340 = vcmp.eq.s32.totalorder %v338, 12
        %vm1341 = vcmp.eq.s32.totalorder %v342, 12
        %vm1342 = vcmp.eq.s32.totalorder %v346, 12
        %vm1343 = vcmp.eq.s32.totalorder %v353, 12
        %vm1344 = vcmp.eq.s32.totalorder %v357, 12
        %vm1345 = vcmp.eq.s32.totalorder %v361, 12
        %vm1346 = vcmp.eq.s32.totalorder %v365, 12
        %vm1347 = vcmp.eq.s32.totalorder %v369, 12
        %vm1348 = vcmp.eq.s32.totalorder %v376, 12
        %vm1349 = vcmp.eq.s32.totalorder %v380, 12
        %vm1350 = vcmp.eq.s32.totalorder %v384, 12
        %vm1351 = vcmp.eq.s32.totalorder %v388, 12
        %vm1352 = vcmp.eq.s32.totalorder %v392, 12
        %v1353 = vld [vmem:[#allocation4 + $0xc] sm:$0x1]
        %v1354 = vsel %vm1333, 1, 0
        %v1355 = vsel %vm1334, 1, 0
        %v1356 = vsel %vm1335, 1, 0
        %v1357 = vsel %vm1336, 1, 0
        %v1358 = vsel %vm1337, 1, 0
        %v1359 = vsel %vm1338, 1, 0
        %v1360 = vsel %vm1339, 1, 0
        %v1361 = vsel %vm1340, 1, 0
        %v1362 = vsel %vm1341, 1, 0
        %v1363 = vsel %vm1342, 1, 0
        %v1364 = vsel %vm1343, 1, 0
        %v1365 = vsel %vm1344, 1, 0
        %v1366 = vsel %vm1345, 1, 0
        %v1367 = vsel %vm1346, 1, 0
        %v1368 = vsel %vm1347, 1, 0
        %v1369 = vsel %vm1348, 1, 0
        %v1370 = vsel %vm1349, 1, 0
        %v1371 = vsel %vm1350, 1, 0
        %v1372 = vsel %vm1351, 1, 0
        %v1373 = vsel %vm1352, 1, 0
        %vm1374 = vcmp.eq.s32.totalorder %v1354, 1
        %vm1375 = vcmp.eq.s32.totalorder %v1355, 1
        %vm1376 = vcmp.eq.s32.totalorder %v1356, 1
        %vm1377 = vcmp.eq.s32.totalorder %v1357, 1
        %vm1378 = vcmp.eq.s32.totalorder %v1358, 1
        %vm1379 = vcmp.eq.s32.totalorder %v1359, 1
        %vm1380 = vcmp.eq.s32.totalorder %v1360, 1
        %vm1381 = vcmp.eq.s32.totalorder %v1361, 1
        %vm1382 = vcmp.eq.s32.totalorder %v1362, 1
        %vm1383 = vcmp.eq.s32.totalorder %v1363, 1
        %vm1384 = vcmp.eq.s32.totalorder %v1364, 1
        %vm1385 = vcmp.eq.s32.totalorder %v1365, 1
        %vm1386 = vcmp.eq.s32.totalorder %v1366, 1
        %vm1387 = vcmp.eq.s32.totalorder %v1367, 1
        %vm1388 = vcmp.eq.s32.totalorder %v1368, 1
        %vm1389 = vcmp.eq.s32.totalorder %v1369, 1
        %vm1390 = vcmp.eq.s32.totalorder %v1370, 1
        %vm1391 = vcmp.eq.s32.totalorder %v1371, 1
        %vm1392 = vcmp.eq.s32.totalorder %v1372, 1
        %vm1393 = vcmp.eq.s32.totalorder %v1373, 1
        %v1394 = vlaneseq
        %v1395 = vshrl.u32 %v1394, 7
        %v1396 = vsub.s32 0, %v1395
        %v1397 = vrot.slane %v1353, %v1396
        %v1398 = vsel %vm1374, %v1397, %v1313
        %v1399 = vsel %vm1375, %v1397, %v1314
        %v1400 = vsel %vm1376, %v1397, %v1315
        %v1401 = vsel %vm1377, %v1397, %v1316
        %v1402 = vsel %vm1378, %v1397, %v1317
        %v1403 = vsel %vm1379, %v1397, %v1318
        %v1404 = vsel %vm1380, %v1397, %v1319
        %v1405 = vsel %vm1381, %v1397, %v1320
        %v1406 = vsel %vm1382, %v1397, %v1321
        %v1407 = vsel %vm1383, %v1397, %v1322
        %v1408 = vsel %vm1384, %v1397, %v1323
        %v1409 = vsel %vm1385, %v1397, %v1324
        %v1410 = vsel %vm1386, %v1397, %v1325
        %v1411 = vsel %vm1387, %v1397, %v1326
        %v1412 = vsel %vm1388, %v1397, %v1327
        %v1413 = vsel %vm1389, %v1397, %v1328
        %v1414 = vsel %vm1390, %v1397, %v1329
        %v1415 = vsel %vm1391, %v1397, %v1330
        %v1416 = vsel %vm1392, %v1397, %v1331
        %v1417 = vsel %vm1393, %v1397, %v1332
        %1418 = vst [vmem:[%s181] sm:$0xff] %v1398
        %1419 = vst [vmem:[%s181 + $0x8] sm:$0xff] %v1399
        %1420 = vst [vmem:[%s181 + $0x10] sm:$0xff] %v1400
        %1421 = vst [vmem:[%s181 + $0x18] sm:$0xff] %v1401
        %1422 = vst [vmem:[%s181 + $0x20] sm:$0x1f] %v1402
        %1423 = vst [vmem:[%s181 + $0x28] sm:$0xff] %v1403
        %1424 = vst [vmem:[%s181 + $0x30] sm:$0xff] %v1404
        %1425 = vst [vmem:[%s181 + $0x38] sm:$0xff] %v1405
        %1426 = vst [vmem:[%s181 + $0x40] sm:$0xff] %v1406
        %1427 = vst [vmem:[%s181 + $0x48] sm:$0x1f] %v1407
        %1428 = vst [vmem:[%s181 + $0x50] sm:$0xff] %v1408
        %1429 = vst [vmem:[%s181 + $0x58] sm:$0xff] %v1409
        %1430 = vst [vmem:[%s181 + $0x60] sm:$0xff] %v1410
        %1431 = vst [vmem:[%s181 + $0x68] sm:$0xff] %v1411
        %1432 = vst [vmem:[%s181 + $0x70] sm:$0x1f] %v1412
        %1433 = vst [vmem:[%s181 + $0x78] sm:$0xff] %v1413
        %1434 = vst [vmem:[%s181 + $0x80] sm:$0xff] %v1414
        %1435 = vst [vmem:[%s181 + $0x88] sm:$0xff] %v1415
        %1436 = vst [vmem:[%s181 + $0x90] sm:$0xff] %v1416
        %1437 = vst [vmem:[%s181 + $0x98] sm:$0x1f] %v1417
        %s1438 = smul.u32 4, %s17
        %p1439 = scmp.lt.s32.totalorder %s1438, 7
        %s1440 = scalar_select %p1439, %s1438, 7
        %s1441 = smul.addr %s1440, 5
        %s1442 = smul.addr %s1441, 8
        %s1443 = scalar_lea.vmem %s2, %s1442
        // Predicated region
        $region37: #{tpu_custom_call.1} parent=27 // pred_check
          %p1444 = pneg %p82
        $region38: #{tpu_custom_call.1} parent=27 // pred_check_branch
          %1446 = sbr.rel (%p1444) target = $region40
        $region39: #{tpu_custom_call.1} parent=27 // pred_region
          %s1447 = smul.u32 4, %s17
        $region40: #{tpu_custom_call.1} parent=27 // pred_fallthru
          _
      $region28: #{tpu_custom_call.1} parent=5 // pred_fallthru
        _
      %p1448 = scmp.le.s32.totalorder 2, %s12
      // Predicated region
      $region41: #{tpu_custom_call.1} parent=5 // pred_check
        %p1449 = pneg %p1448
      $region42: #{tpu_custom_call.1} parent=5 // pred_check_branch
        %1451 = sbr.rel (%p1449) target = $region44
      $region43: #{tpu_custom_call.1} parent=5 // pred_region
        %s1452 = ssub.s32 %s12, 2
        // Predicated region
        $region45: #{tpu_custom_call.1} parent=43 // pred_check
          %p1453 = pneg %p88
        $region46: #{tpu_custom_call.1} parent=43 // pred_check_branch
          %1455 = sbr.rel (%p1453) target = $region48
        $region47: #{tpu_custom_call.1} parent=43 // pred_region
          %s1456 = smul.u32 4, %s18
          %p1457 = scmp.lt.s32.totalorder %s1456, 7
          %s1458 = scalar_select %p1457, %s1456, 7
          %s1459 = smul.addr %s1458, 5
          %s1460 = smul.addr %s1459, 8
          %s1461 = scalar_lea.vmem %s2, %s1460
        $region48: #{tpu_custom_call.1} parent=43 // pred_fallthru
          _
      $region44: #{tpu_custom_call.1} parent=5 // pred_fallthru
        _
    $region6: #{tpu_custom_call.1} parent=1 // loop_footer
      %s16 = sadd.s32 1, %s12
    $region7: #{tpu_custom_call.1} parent=1 // loop_footer_branch
      %11 = sbr.rel target = $region3
    $region8: #{tpu_custom_call.1} parent=1 // loop_exit
      _
    %1462 = vsyncpa [#allocation3], 1
    %s1463 = scalar_lea.sflag [#allocation3], 1
    %1464 = vsyncpa %s1463, 1
    %1465 = vsyncpa [#allocation5], 1

</llo_original>
